<compile_context>
chip_gen: v6e
topology: v6e:2x2x1
jax: 0.10.0
libtpu: 0.0.40
codegen_flags: <defaults>
</compile_context>

<pallas_src>
import functools
import math

import jax
import jax.numpy as jnp
from jax import lax
from jax.experimental import pallas as pl
from jax.experimental.pallas import tpu as pltpu


def _mhsa_kernel(x_ref, wq_ref, bq_ref, wkv_ref, bkv_ref, wo_ref, bo_ref,
                 o_ref, kv_ref, q_ref, att_ref, *,
                 num_heads, head_dim, scale, n_valid, kv_chunk, approx_recip):
    """One grid step == (one batch element, one query tile)."""
    cdt = x_ref.dtype                       # MXU operand dtype (bf16 stays bf16)
    embed_dim = num_heads * head_dim
    n_pad = x_ref.shape[1]
    tq = o_ref.shape[1]
    qi = pl.program_id(1)

    # ---- K/V projection: once per batch element, in row chunks ------------
    @pl.when(qi == 0)
    def _project_kv():
        wkv = wkv_ref[...]                  # (D, 2D), loaded once
        bkv = bkv_ref[...]                  # (1, 2D)

        @pl.loop(0, n_pad // kv_chunk)
        def _(c):
            r0 = pl.multiple_of(c * kv_chunk, kv_chunk)
            xc = x_ref[0, pl.ds(r0, kv_chunk), :]
            kv_ref[pl.ds(r0, kv_chunk), :] = (
                jnp.dot(xc, wkv, preferred_element_type=jnp.float32) + bkv
            ).astype(cdt)

    # ---- Q projection for this query tile (sliced from the resident block) -
    xq = x_ref[0, pl.ds(pl.multiple_of(qi * tq, tq), tq), :]
    q = jnp.dot(xq, wq_ref[...], preferred_element_type=jnp.float32) + bq_ref[...]
    q_ref[...] = (q * scale).astype(cdt)    # fold 1/sqrt(head_dim) into q once

    # Padded-key mask (only materialized when the sequence was padded).
    key_mask = None
    if n_valid < n_pad:
        key_mask = lax.broadcasted_iota(jnp.int32, (1, n_pad), 1) < n_valid

    def attend_head(off):
        qh = q_ref[:, pl.ds(off, head_dim)]                 # (TQ, hd)
        kh = kv_ref[:, pl.ds(off, head_dim)]                # (N,  hd)
        vh = kv_ref[:, pl.ds(embed_dim + off, head_dim)]    # (N,  hd)

        # (TQ, hd) x (N, hd), contracting the last dims -> no K transpose.
        s = lax.dot_general(qh, kh, (((1,), (1,)), ((), ())),
                            preferred_element_type=jnp.float32)   # (TQ, N) f32
        if key_mask is not None:
            s = jnp.where(key_mask, s, -jnp.inf)

        m = jnp.max(s, axis=-1, keepdims=True)
        z = s - m
        # bf16 exp on v6e/v7x EUP when the compute dtype is low precision.
        p = jnp.exp(z) if cdt == jnp.float32 else jnp.exp(z.astype(cdt))
        l = jnp.sum(p, axis=-1, keepdims=True, dtype=jnp.float32)  # (TQ, 1)

        # Unnormalized PV, then deferred normalization on the narrow result.
        oh = jnp.dot(p.astype(cdt), vh, preferred_element_type=jnp.float32)
        oh = oh * pl.reciprocal(l, approx=approx_recip)            # (TQ, hd)
        att_ref[:, pl.ds(off, head_dim)] = oh.astype(cdt)

    if head_dim % 128 == 0:
        # Lane-aligned dynamic slices: loop form bounds live ranges for big H.
        @pl.loop(0, num_heads)
        def _(h):
            attend_head(pl.multiple_of(h * head_dim, head_dim))
    else:
        # TODO(synk): for unaligned head_dim, a loop-carried (fori) version
        # needs a head-major KV scratch layout to avoid unaligned dynamic lane
        # slices; a static unroll is kept for that case.
        for h in range(num_heads):
            attend_head(h * head_dim)

    # ---- One deep output projection: (TQ, D) @ (D, D) ---------------------
    out = jnp.dot(att_ref[...], wo_ref[...], preferred_element_type=jnp.float32)
    o_ref[0] = (out + bo_ref[...]).astype(o_ref.dtype)


def prepare_params(params):
    """Fuse K/V projection weights/biases ONCE (not per forward call)."""
    return dict(
        wq=params["wq"], bq=params["bq"],
        wkv=jnp.concatenate([params["wk"], params["wv"]], axis=1),
        bkv=jnp.concatenate([params["bk"], params["bv"]], axis=1),
        wo=params["wo"], bo=params["bo"],
    )


def _vmem_limit_bytes(n_pad, d, tq, itemsize):
    """Shape-derived scoped-VMEM request, clamped to the chip's capacity."""
    try:
        physical = int(pltpu.get_tpu_info().vmem_capacity_bytes)
    except Exception:
        physical = 64 << 20                        # v7x per-core floor
    weights = (4 * d * d + 4 * d) * itemsize       # single-buffered (Buffered(1))
    x_block = 2 * n_pad * d * itemsize             # double-buffered seq block
    out_blk = 2 * tq * d * itemsize
    scratch = (2 * n_pad * d + 2 * tq * d) * itemsize   # kv + q + att scratch
    transient = (tq * n_pad + 3 * tq * d) * 4      # f32 scores / q / proj chunk
    est = weights + x_block + out_blk + scratch + transient + (4 << 20)
    # TODO(synk): when `est` exceeds v7x's 64 MiB (long N at large D), switch to
    # a flash-style KV-tiled grid axis (online softmax) instead of raising this.
    return int(min(max(est, 16 << 20), max(physical - (16 << 20), 32 << 20)))


def multi_head_self_attention(x, fused_params, *, num_heads,
                              dot_product_norm=True, q_tile=256):
    """x: (B, N, D). fused_params: output of prepare_params()."""
    B, N, D = x.shape
    assert D % num_heads == 0, "embed_dim must be divisible by num_heads"
    head_dim = D // num_heads
    scale = 1.0 / math.sqrt(head_dim) if dot_product_norm else 1.0

    # Query tile + padding: pad N to a multiple of the tile; padded keys are
    # masked inside the kernel, padded query rows are sliced off below.
    tq = q_tile if N > q_tile else N
    n_pad = pl.cdiv(N, tq) * tq
    x_in = x if n_pad == N else jnp.pad(x, ((0, 0), (0, n_pad - N), (0, 0)))

    kernel = functools.partial(
        _mhsa_kernel, num_heads=num_heads, head_dim=head_dim, scale=scale,
        n_valid=N, kv_chunk=tq, approx_recip=(x.dtype != jnp.float32))

    inv = lambda b, qi: (0, 0)                     # grid-invariant -> resident
    resident = functools.partial(pl.BlockSpec, index_map=inv,
                                 pipeline_mode=pl.Buffered(1))

    out = pl.pallas_call(
        kernel,
        out_shape=jax.ShapeDtypeStruct((B, n_pad, D), x.dtype),
        grid_spec=pltpu.PrefetchScalarGridSpec(
            num_scalar_prefetch=0,
            grid=(B, n_pad // tq),
            in_specs=[
                pl.BlockSpec((1, n_pad, D), lambda b, qi: (b, 0, 0)),  # x (full seq)
                resident((D, D)),          # wq
                resident((1, D)),          # bq
                resident((D, 2 * D)),      # wkv (fused K/V)
                resident((1, 2 * D)),      # bkv
                resident((D, D)),          # wo
                resident((1, D)),          # bo
            ],
            out_specs=pl.BlockSpec((1, tq, D), lambda b, qi: (b, qi, 0)),
            scratch_shapes=[
                pltpu.VMEM((n_pad, 2 * D), x.dtype),   # cached K/V projection
                pltpu.VMEM((tq, D), x.dtype),          # scaled Q tile
                pltpu.VMEM((tq, D), x.dtype),          # concatenated head outputs
            ],
        ),
        compiler_params=pltpu.CompilerParams(
            # qi axis reuses the KV scratch written at qi == 0 -> "arbitrary".
            dimension_semantics=("parallel", "arbitrary"),
            vmem_limit_bytes=_vmem_limit_bytes(n_pad, D, tq, x.dtype.itemsize),
        ),
    )(x_in,
      fused_params["wq"], fused_params["bq"],
      fused_params["wkv"], fused_params["bkv"],
      fused_params["wo"], fused_params["bo"])

    return out if n_pad == N else out[:, :N, :]


def reference_mhsa(x, params, *, num_heads, dot_product_norm=True):
    """Pure-JAX reference mirroring the PyTorch forward (mask=None)."""
    B, N, D = x.shape
    hd = D // num_heads
    q = x @ params["wq"] + params["bq"]
    k = x @ params["wk"] + params["bk"]
    v = x @ params["wv"] + params["bv"]
    q = q.reshape(B, N, num_heads, hd).transpose(0, 2, 1, 3)
    k = k.reshape(B, N, num_heads, hd).transpose(0, 2, 1, 3)
    v = v.reshape(B, N, num_heads, hd).transpose(0, 2, 1, 3)
    scores = jnp.einsum("bhqd,bhkd->bhqk", q, k)
    if dot_product_norm:
        scores = scores / math.sqrt(hd)
    attn = jax.nn.softmax(scores, axis=-1)
    attended = jnp.einsum("bhqk,bhkd->bhqd", attn, v)
    attended = attended.transpose(0, 2, 1, 3).reshape(B, N, D)
    return attended @ params["wo"] + params["bo"]


def init_params(key, embed_dim):
    """Deterministic init mimicking nn.Linear default uniform(-1/sqrt(in), 1/sqrt(in))."""
    bound = 1.0 / math.sqrt(embed_dim)
    keys = jax.random.split(key, 8)

    def lin(kw, kb):
        # stored as (D_in, D_out) == PyTorch weight.T
        w = jax.random.uniform(kw, (embed_dim, embed_dim), jnp.float32, -bound, bound)
        b = jax.random.uniform(kb, (1, embed_dim), jnp.float32, -bound, bound)
        return w, b

    wq, bq = lin(keys[0], keys[1])
    wk, bk = lin(keys[2], keys[3])
    wv, bv = lin(keys[4], keys[5])
    wo, bo = lin(keys[6], keys[7])
    return dict(wq=wq, bq=bq, wk=wk, bk=bk, wv=wv, bv=bv, wo=wo, bo=bo)


if __name__ == "__main__":
    # TODO(synk): optional attention-mask argument (mask=None path only).
    key = jax.random.PRNGKey(0)
    k_x, k_p, k_x2 = jax.random.split(key, 3)

    # Test 1: small shape from the module spec (single query tile).
    B, N, D, H = 2, 8, 32, 4
    x = jax.random.normal(k_x, (B, N, D), jnp.float32)
    params = init_params(k_p, D)
    fused = prepare_params(params)          # K/V weight fusion done once

    out = multi_head_self_attention(x, fused, num_heads=H, dot_product_norm=True)
    out = jax.block_until_ready(out)
    ref = reference_mhsa(x, params, num_heads=H, dot_product_norm=True)
    assert out.shape == (B, N, D)
    assert jnp.allclose(out, ref, atol=1e-4, rtol=1e-4), "mismatch (single tile)"

    # Test 2: multiple query tiles + padded/masked keys (exercises the cached
    # KV-scratch reuse across query tiles and the padding mask).
    N2 = 20
    x2 = jax.random.normal(k_x2, (B, N2, D), jnp.float32)
    out2 = multi_head_self_attention(x2, fused, num_heads=H, q_tile=8)
    out2 = jax.block_until_ready(out2)
    ref2 = reference_mhsa(x2, params, num_heads=H)
    assert out2.shape == (B, N2, D)
    assert jnp.allclose(out2, ref2, atol=1e-4, rtol=1e-4), "mismatch (multi tile)"

    print("KERNEL_OK")
</pallas_src>

<mosaic_0001>
module attributes {stable_mosaic.version = 11 : i64} {
  func.func @_mhsa_kernel(%arg0: i32, %arg1: i32, %arg2: memref<1x8x32xf32, #tpu.memory_space<vmem>>, %arg3: memref<32x32xf32, #tpu.memory_space<vmem>>, %arg4: memref<1x32xf32, #tpu.memory_space<vmem>>, %arg5: memref<32x64xf32, #tpu.memory_space<vmem>>, %arg6: memref<1x64xf32, #tpu.memory_space<vmem>>, %arg7: memref<32x32xf32, #tpu.memory_space<vmem>>, %arg8: memref<1x32xf32, #tpu.memory_space<vmem>>, %arg9: memref<1x8x32xf32, #tpu.memory_space<vmem>>, %arg10: memref<8x64xf32, #tpu.memory_space<vmem>>, %arg11: memref<8x32xf32, #tpu.memory_space<vmem>>, %arg12: memref<8x32xf32, #tpu.memory_space<vmem>>) attributes {dimension_semantics = [#tpu.dimension_semantics<parallel>, #tpu.dimension_semantics<arbitrary>], iteration_bounds = array<i64: 2, 1>, scalar_prefetch = 0 : i64, scratch_operands = 3 : i64, tpu.core_type = #tpu.core_type<tc>, window_params = [{transform_indices = @transform_0, window_bounds = array<i64: 1, 8, 32>}, {pipeline_mode = #tpu.pipeline_mode<synchronous>, transform_indices = @transform_1, window_bounds = array<i64: 32, 32>}, {pipeline_mode = #tpu.pipeline_mode<synchronous>, transform_indices = @transform_2, window_bounds = array<i64: 1, 32>}, {pipeline_mode = #tpu.pipeline_mode<synchronous>, transform_indices = @transform_3, window_bounds = array<i64: 32, 64>}, {pipeline_mode = #tpu.pipeline_mode<synchronous>, transform_indices = @transform_4, window_bounds = array<i64: 1, 64>}, {pipeline_mode = #tpu.pipeline_mode<synchronous>, transform_indices = @transform_5, window_bounds = array<i64: 32, 32>}, {pipeline_mode = #tpu.pipeline_mode<synchronous>, transform_indices = @transform_6, window_bounds = array<i64: 1, 32>}, {transform_indices = @transform_7, window_bounds = array<i64: 1, 8, 32>}]} {
    %c0_i32 = arith.constant 0 : i32
    %0 = arith.cmpi eq, %arg1, %c0_i32 : i32
    %1 = arith.extui %0 : i1 to i32
    %c0_i32_0 = arith.constant 0 : i32
    %2 = arith.cmpi ne, %1, %c0_i32_0 : i32
    scf.if %2 {
      %c0_60 = arith.constant 0 : index
      %c0_61 = arith.constant 0 : index
      %89 = vector.load %arg5[%c0_60, %c0_61] : memref<32x64xf32, #tpu.memory_space<vmem>>, vector<32x64xf32>
      %c0_62 = arith.constant 0 : index
      %c0_63 = arith.constant 0 : index
      %90 = vector.load %arg6[%c0_62, %c0_63] : memref<1x64xf32, #tpu.memory_space<vmem>>, vector<1x64xf32>
      %c0_i32_64 = arith.constant 0 : i32
      %c1_i32 = arith.constant 1 : i32
      %91 = arith.muli %c0_i32_64, %c1_i32 : i32
      %c0_i32_65 = arith.constant 0 : i32
      %92 = arith.addi %c0_i32_65, %91 : i32
      %c8_i32_66 = arith.constant 8 : i32
      %93 = arith.muli %92, %c8_i32_66 : i32
      %94 = tpu.assume_multiple %93, 8 : i32
      %c0_67 = arith.constant 0 : index
      %95 = arith.index_cast %94 : i32 to index
      %c0_68 = arith.constant 0 : index
      %96 = vector.load %arg2[%c0_67, %95, %c0_68] : memref<1x8x32xf32, #tpu.memory_space<vmem>>, vector<1x8x32xf32>
      %97 = vector.shape_cast %96 : vector<1x8x32xf32> to vector<8x32xf32>
      %cst_69 = arith.constant dense<0.000000e+00> : vector<8x64xf32>
      %98 = tpu.matmul %97, %89, %cst_69 {dimension_numbers = #tpu.dot_dimension_numbers<[1], [0], [0], [1], [0, 0, 1, 1], [], []>} : vector<8x32xf32>, vector<32x64xf32>, vector<8x64xf32> -> vector<8x64xf32>
      %99 = vector.broadcast %90 : vector<1x64xf32> to vector<8x64xf32>
      %100 = arith.addf %98, %99 : vector<8x64xf32>
      %101 = arith.index_cast %94 : i32 to index
      %c0_70 = arith.constant 0 : index
      %102 = vector.load %arg10[%101, %c0_70] : memref<8x64xf32, #tpu.memory_space<vmem>>, vector<8x64xf32>
      tpu.vector_store %arg10[%101, %c0_70], %100 {strides = array<i32>} : memref<8x64xf32, #tpu.memory_space<vmem>>, vector<8x64xf32>,
      %c1_i32_71 = arith.constant 1 : i32
    } else {
    }
    %c8_i32 = arith.constant 8 : i32
    %3 = arith.muli %arg1, %c8_i32 : i32
    %4 = tpu.assume_multiple %3, 8 : i32
    %c0 = arith.constant 0 : index
    %5 = arith.index_cast %4 : i32 to index
    %c0_1 = arith.constant 0 : index
    %6 = vector.load %arg2[%c0, %5, %c0_1] : memref<1x8x32xf32, #tpu.memory_space<vmem>>, vector<1x8x32xf32>
    %7 = vector.shape_cast %6 : vector<1x8x32xf32> to vector<8x32xf32>
    %c0_2 = arith.constant 0 : index
    %c0_3 = arith.constant 0 : index
    %8 = vector.load %arg3[%c0_2, %c0_3] : memref<32x32xf32, #tpu.memory_space<vmem>>, vector<32x32xf32>
    %cst = arith.constant dense<0.000000e+00> : vector<8x32xf32>
    %9 = tpu.matmul %7, %8, %cst {dimension_numbers = #tpu.dot_dimension_numbers<[1], [0], [0], [1], [0, 0, 1, 1], [], []>} : vector<8x32xf32>, vector<32x32xf32>, vector<8x32xf32> -> vector<8x32xf32>
    %c0_4 = arith.constant 0 : index
    %c0_5 = arith.constant 0 : index
    %10 = vector.load %arg4[%c0_4, %c0_5] : memref<1x32xf32, #tpu.memory_space<vmem>>, vector<1x32xf32>
    %11 = vector.broadcast %10 : vector<1x32xf32> to vector<8x32xf32>
    %12 = arith.addf %9, %11 : vector<8x32xf32>
    %cst_6 = arith.constant 0.353553385 : f32
    %13 = vector.broadcast %cst_6 : f32 to vector<8x32xf32>
    %14 = arith.mulf %12, %13 : vector<8x32xf32>
    %c0_7 = arith.constant 0 : index
    %c0_8 = arith.constant 0 : index
    %15 = vector.load %arg11[%c0_7, %c0_8] : memref<8x32xf32, #tpu.memory_space<vmem>>, vector<8x32xf32>
    tpu.vector_store %arg11[%c0_7, %c0_8], %14 {strides = array<i32>} : memref<8x32xf32, #tpu.memory_space<vmem>>, vector<8x32xf32>,
    %c0_9 = arith.constant 0 : index
    %c0_10 = arith.constant 0 : index
    %16 = vector.load %arg11[%c0_9, %c0_10] : memref<8x32xf32, #tpu.memory_space<vmem>>, vector<8x8xf32>
    %c0_11 = arith.constant 0 : index
    %c0_12 = arith.constant 0 : index
    %17 = vector.load %arg10[%c0_11, %c0_12] : memref<8x64xf32, #tpu.memory_space<vmem>>, vector<8x8xf32>
    %c0_13 = arith.constant 0 : index
    %c32 = arith.constant 32 : index
    %18 = vector.load %arg10[%c0_13, %c32] : memref<8x64xf32, #tpu.memory_space<vmem>>, vector<8x8xf32>
    %cst_14 = arith.constant dense<0.000000e+00> : vector<8x8xf32>
    %19 = tpu.matmul %16, %17, %cst_14 {dimension_numbers = #tpu.dot_dimension_numbers<[1], [1], [0], [0], [0, 0, 1, 0], [], []>} : vector<8x8xf32>, vector<8x8xf32>, vector<8x8xf32> -> vector<8x8xf32>
    %cst_15 = arith.constant dense<0xFF800000> : vector<8xf32>
    %20 = vector.multi_reduction <maximumf>, %19, %cst_15 [1] : vector<8x8xf32> to vector<8xf32>
    %21 = vector.shape_cast %20 : vector<8xf32> to vector<8x1xf32>
    %22 = vector.broadcast %21 : vector<8x1xf32> to vector<8x8xf32>
    %23 = arith.subf %19, %22 : vector<8x8xf32>
    %24 = math.exp %23 : vector<8x8xf32>
    %cst_16 = arith.constant dense<0.000000e+00> : vector<8xf32>
    %25 = vector.multi_reduction <add>, %24, %cst_16 [1] : vector<8x8xf32> to vector<8xf32>
    %26 = vector.shape_cast %25 : vector<8xf32> to vector<8x1xf32>
    %cst_17 = arith.constant dense<0.000000e+00> : vector<8x8xf32>
    %27 = tpu.matmul %24, %18, %cst_17 {dimension_numbers = #tpu.dot_dimension_numbers<[1], [0], [0], [1], [0, 0, 1, 1], [], []>} : vector<8x8xf32>, vector<8x8xf32>, vector<8x8xf32> -> vector<8x8xf32>
    %28 = tpu.reciprocal %26 : vector<8x1xf32> -> vector<8x1xf32>
    %29 = vector.broadcast %28 : vector<8x1xf32> to vector<8x8xf32>
    %30 = arith.mulf %27, %29 : vector<8x8xf32>
    %c0_18 = arith.constant 0 : index
    %c0_19 = arith.constant 0 : index
    %31 = vector.load %arg12[%c0_18, %c0_19] : memref<8x32xf32, #tpu.memory_space<vmem>>, vector<8x8xf32>
    tpu.vector_store %arg12[%c0_18, %c0_19], %30 {strides = array<i32>} : memref<8x32xf32, #tpu.memory_space<vmem>>, vector<8x8xf32>,
    %c0_20 = arith.constant 0 : index
    %c8 = arith.constant 8 : index
    %32 = vector.load %arg11[%c0_20, %c8] : memref<8x32xf32, #tpu.memory_space<vmem>>, vector<8x8xf32>
    %c0_21 = arith.constant 0 : index
    %c8_22 = arith.constant 8 : index
    %33 = vector.load %arg10[%c0_21, %c8_22] : memref<8x64xf32, #tpu.memory_space<vmem>>, vector<8x8xf32>
    %c0_23 = arith.constant 0 : index
    %c40 = arith.constant 40 : index
    %34 = vector.load %arg10[%c0_23, %c40] : memref<8x64xf32, #tpu.memory_space<vmem>>, vector<8x8xf32>
    %cst_24 = arith.constant dense<0.000000e+00> : vector<8x8xf32>
    %35 = tpu.matmul %32, %33, %cst_24 {dimension_numbers = #tpu.dot_dimension_numbers<[1], [1], [0], [0], [0, 0, 1, 0], [], []>} : vector<8x8xf32>, vector<8x8xf32>, vector<8x8xf32> -> vector<8x8xf32>
    %cst_25 = arith.constant dense<0xFF800000> : vector<8xf32>
    %36 = vector.multi_reduction <maximumf>, %35, %cst_25 [1] : vector<8x8xf32> to vector<8xf32>
    %37 = vector.shape_cast %36 : vector<8xf32> to vector<8x1xf32>
    %38 = vector.broadcast %37 : vector<8x1xf32> to vector<8x8xf32>
    %39 = arith.subf %35, %38 : vector<8x8xf32>
    %40 = math.exp %39 : vector<8x8xf32>
    %cst_26 = arith.constant dense<0.000000e+00> : vector<8xf32>
    %41 = vector.multi_reduction <add>, %40, %cst_26 [1] : vector<8x8xf32> to vector<8xf32>
    %42 = vector.shape_cast %41 : vector<8xf32> to vector<8x1xf32>
    %cst_27 = arith.constant dense<0.000000e+00> : vector<8x8xf32>
    %43 = tpu.matmul %40, %34, %cst_27 {dimension_numbers = #tpu.dot_dimension_numbers<[1], [0], [0], [1], [0, 0, 1, 1], [], []>} : vector<8x8xf32>, vector<8x8xf32>, vector<8x8xf32> -> vector<8x8xf32>
    %44 = tpu.reciprocal %42 : vector<8x1xf32> -> vector<8x1xf32>
    %45 = vector.broadcast %44 : vector<8x1xf32> to vector<8x8xf32>
    %46 = arith.mulf %43, %45 : vector<8x8xf32>
    %c0_28 = arith.constant 0 : index
    %c8_29 = arith.constant 8 : index
    %47 = vector.load %arg12[%c0_28, %c8_29] : memref<8x32xf32, #tpu.memory_space<vmem>>, vector<8x8xf32>
    tpu.vector_store %arg12[%c0_28, %c8_29], %46 {strides = array<i32>} : memref<8x32xf32, #tpu.memory_space<vmem>>, vector<8x8xf32>,
    %c0_30 = arith.constant 0 : index
    %c16 = arith.constant 16 : index
    %48 = vector.load %arg11[%c0_30, %c16] : memref<8x32xf32, #tpu.memory_space<vmem>>, vector<8x8xf32>
    %c0_31 = arith.constant 0 : index
    %c16_32 = arith.constant 16 : index
    %49 = vector.load %arg10[%c0_31, %c16_32] : memref<8x64xf32, #tpu.memory_space<vmem>>, vector<8x8xf32>
    %c0_33 = arith.constant 0 : index
    %c48 = arith.constant 48 : index
    %50 = vector.load %arg10[%c0_33, %c48] : memref<8x64xf32, #tpu.memory_space<vmem>>, vector<8x8xf32>
    %cst_34 = arith.constant dense<0.000000e+00> : vector<8x8xf32>
    %51 = tpu.matmul %48, %49, %cst_34 {dimension_numbers = #tpu.dot_dimension_numbers<[1], [1], [0], [0], [0, 0, 1, 0], [], []>} : vector<8x8xf32>, vector<8x8xf32>, vector<8x8xf32> -> vector<8x8xf32>
    %cst_35 = arith.constant dense<0xFF800000> : vector<8xf32>
    %52 = vector.multi_reduction <maximumf>, %51, %cst_35 [1] : vector<8x8xf32> to vector<8xf32>
    %53 = vector.shape_cast %52 : vector<8xf32> to vector<8x1xf32>
    %54 = vector.broadcast %53 : vector<8x1xf32> to vector<8x8xf32>
    %55 = arith.subf %51, %54 : vector<8x8xf32>
    %56 = math.exp %55 : vector<8x8xf32>
    %cst_36 = arith.constant dense<0.000000e+00> : vector<8xf32>
    %57 = vector.multi_reduction <add>, %56, %cst_36 [1] : vector<8x8xf32> to vector<8xf32>
    %58 = vector.shape_cast %57 : vector<8xf32> to vector<8x1xf32>
    %cst_37 = arith.constant dense<0.000000e+00> : vector<8x8xf32>
    %59 = tpu.matmul %56, %50, %cst_37 {dimension_numbers = #tpu.dot_dimension_numbers<[1], [0], [0], [1], [0, 0, 1, 1], [], []>} : vector<8x8xf32>, vector<8x8xf32>, vector<8x8xf32> -> vector<8x8xf32>
    %60 = tpu.reciprocal %58 : vector<8x1xf32> -> vector<8x1xf32>
    %61 = vector.broadcast %60 : vector<8x1xf32> to vector<8x8xf32>
    %62 = arith.mulf %59, %61 : vector<8x8xf32>
    %c0_38 = arith.constant 0 : index
    %c16_39 = arith.constant 16 : index
    %63 = vector.load %arg12[%c0_38, %c16_39] : memref<8x32xf32, #tpu.memory_space<vmem>>, vector<8x8xf32>
    tpu.vector_store %arg12[%c0_38, %c16_39], %62 {strides = array<i32>} : memref<8x32xf32, #tpu.memory_space<vmem>>, vector<8x8xf32>,
    %c0_40 = arith.constant 0 : index
    %c24 = arith.constant 24 : index
    %64 = vector.load %arg11[%c0_40, %c24] : memref<8x32xf32, #tpu.memory_space<vmem>>, vector<8x8xf32>
    %c0_41 = arith.constant 0 : index
    %c24_42 = arith.constant 24 : index
    %65 = vector.load %arg10[%c0_41, %c24_42] : memref<8x64xf32, #tpu.memory_space<vmem>>, vector<8x8xf32>
    %c0_43 = arith.constant 0 : index
    %c56 = arith.constant 56 : index
    %66 = vector.load %arg10[%c0_43, %c56] : memref<8x64xf32, #tpu.memory_space<vmem>>, vector<8x8xf32>
    %cst_44 = arith.constant dense<0.000000e+00> : vector<8x8xf32>
    %67 = tpu.matmul %64, %65, %cst_44 {dimension_numbers = #tpu.dot_dimension_numbers<[1], [1], [0], [0], [0, 0, 1, 0], [], []>} : vector<8x8xf32>, vector<8x8xf32>, vector<8x8xf32> -> vector<8x8xf32>
    %cst_45 = arith.constant dense<0xFF800000> : vector<8xf32>
    %68 = vector.multi_reduction <maximumf>, %67, %cst_45 [1] : vector<8x8xf32> to vector<8xf32>
    %69 = vector.shape_cast %68 : vector<8xf32> to vector<8x1xf32>
    %70 = vector.broadcast %69 : vector<8x1xf32> to vector<8x8xf32>
    %71 = arith.subf %67, %70 : vector<8x8xf32>
    %72 = math.exp %71 : vector<8x8xf32>
    %cst_46 = arith.constant dense<0.000000e+00> : vector<8xf32>
    %73 = vector.multi_reduction <add>, %72, %cst_46 [1] : vector<8x8xf32> to vector<8xf32>
    %74 = vector.shape_cast %73 : vector<8xf32> to vector<8x1xf32>
    %cst_47 = arith.constant dense<0.000000e+00> : vector<8x8xf32>
    %75 = tpu.matmul %72, %66, %cst_47 {dimension_numbers = #tpu.dot_dimension_numbers<[1], [0], [0], [1], [0, 0, 1, 1], [], []>} : vector<8x8xf32>, vector<8x8xf32>, vector<8x8xf32> -> vector<8x8xf32>
    %76 = tpu.reciprocal %74 : vector<8x1xf32> -> vector<8x1xf32>
    %77 = vector.broadcast %76 : vector<8x1xf32> to vector<8x8xf32>
    %78 = arith.mulf %75, %77 : vector<8x8xf32>
    %c0_48 = arith.constant 0 : index
    %c24_49 = arith.constant 24 : index
    %79 = vector.load %arg12[%c0_48, %c24_49] : memref<8x32xf32, #tpu.memory_space<vmem>>, vector<8x8xf32>
    tpu.vector_store %arg12[%c0_48, %c24_49], %78 {strides = array<i32>} : memref<8x32xf32, #tpu.memory_space<vmem>>, vector<8x8xf32>,
    %c0_50 = arith.constant 0 : index
    %c0_51 = arith.constant 0 : index
    %80 = vector.load %arg12[%c0_50, %c0_51] : memref<8x32xf32, #tpu.memory_space<vmem>>, vector<8x32xf32>
    %c0_52 = arith.constant 0 : index
    %c0_53 = arith.constant 0 : index
    %81 = vector.load %arg7[%c0_52, %c0_53] : memref<32x32xf32, #tpu.memory_space<vmem>>, vector<32x32xf32>
    %cst_54 = arith.constant dense<0.000000e+00> : vector<8x32xf32>
    %82 = tpu.matmul %80, %81, %cst_54 {dimension_numbers = #tpu.dot_dimension_numbers<[1], [0], [0], [1], [0, 0, 1, 1], [], []>} : vector<8x32xf32>, vector<32x32xf32>, vector<8x32xf32> -> vector<8x32xf32>
    %c0_55 = arith.constant 0 : index
    %c0_56 = arith.constant 0 : index
    %83 = vector.load %arg8[%c0_55, %c0_56] : memref<1x32xf32, #tpu.memory_space<vmem>>, vector<1x32xf32>
    %84 = vector.broadcast %83 : vector<1x32xf32> to vector<8x32xf32>
    %85 = arith.addf %82, %84 : vector<8x32xf32>
    %c0_57 = arith.constant 0 : index
    %c0_58 = arith.constant 0 : index
    %c0_59 = arith.constant 0 : index
    %86 = vector.load %arg9[%c0_57, %c0_58, %c0_59] : memref<1x8x32xf32, #tpu.memory_space<vmem>>, vector<1x8x32xf32>
    %87 = vector.shape_cast %86 : vector<1x8x32xf32> to vector<8x32xf32>
    %88 = vector.shape_cast %85 : vector<8x32xf32> to vector<1x8x32xf32>
    tpu.vector_store %arg9[%c0_57, %c0_58, %c0_59], %88 {strides = array<i32>} : memref<1x8x32xf32, #tpu.memory_space<vmem>>, vector<1x8x32xf32>,
    return
  }
  func.func @transform_0(%arg0: i32, %arg1: i32) -> (i32, i32, i32) {
    %c0_i32 = arith.constant 0 : i32
    %c0_i32_0 = arith.constant 0 : i32
    %c0_i32_1 = arith.constant 0 : i32
    return %arg0, %c0_i32, %c0_i32_0 : i32, i32, i32
  }
  func.func @transform_1(%arg0: i32, %arg1: i32) -> (i32, i32) {
    %c0_i32 = arith.constant 0 : i32
    %c0_i32_0 = arith.constant 0 : i32
    %c0_i32_1 = arith.constant 0 : i32
    return %c0_i32, %c0_i32_0 : i32, i32
  }
  func.func @transform_2(%arg0: i32, %arg1: i32) -> (i32, i32) {
    %c0_i32 = arith.constant 0 : i32
    %c0_i32_0 = arith.constant 0 : i32
    %c0_i32_1 = arith.constant 0 : i32
    return %c0_i32, %c0_i32_0 : i32, i32
  }
  func.func @transform_3(%arg0: i32, %arg1: i32) -> (i32, i32) {
    %c0_i32 = arith.constant 0 : i32
    %c0_i32_0 = arith.constant 0 : i32
    %c0_i32_1 = arith.constant 0 : i32
    return %c0_i32, %c0_i32_0 : i32, i32
  }
  func.func @transform_4(%arg0: i32, %arg1: i32) -> (i32, i32) {
    %c0_i32 = arith.constant 0 : i32
    %c0_i32_0 = arith.constant 0 : i32
    %c0_i32_1 = arith.constant 0 : i32
    return %c0_i32, %c0_i32_0 : i32, i32
  }
  func.func @transform_5(%arg0: i32, %arg1: i32) -> (i32, i32) {
    %c0_i32 = arith.constant 0 : i32
    %c0_i32_0 = arith.constant 0 : i32
    %c0_i32_1 = arith.constant 0 : i32
    return %c0_i32, %c0_i32_0 : i32, i32
  }
  func.func @transform_6(%arg0: i32, %arg1: i32) -> (i32, i32) {
    %c0_i32 = arith.constant 0 : i32
    %c0_i32_0 = arith.constant 0 : i32
    %c0_i32_1 = arith.constant 0 : i32
    return %c0_i32, %c0_i32_0 : i32, i32
  }
  func.func @transform_7(%arg0: i32, %arg1: i32) -> (i32, i32, i32) {
    %c0_i32 = arith.constant 0 : i32
    %c0_i32_0 = arith.constant 0 : i32
    return %arg0, %arg1, %c0_i32 : i32, i32, i32
  }
}

</mosaic_0001>

<llo_original>
// kernel: tpu_custom_call.1
$region0: #{tpu_custom_call.1}
  #allocation0 [shape = 'u32[]', space=smem, size = 0x4, offset = 0x4, fixed_abs, tag = 'smem constant byte address 0x4 - core index']
  #allocation1 [shape = 'u32[144,128]{1,0:T(1,128)}', space=vmem, size = 0x12000, scoped, tag = 'internal scratch']
  #allocation2 [shape = 'f32[8,64]{1,0:T(8,128)}', space=vmem, size = 0x1000, scoped, tag = 'scratch operand']
  #allocation3 [shape = 'f32[8,32]{1,0:T(8,128)}', space=vmem, size = 0x1000, scoped, tag = 'scratch operand']
  #allocation4 [shape = 'f32[8,32]{1,0:T(8,128)}', space=vmem, size = 0x1000, scoped, tag = 'scratch operand']
  %s0 = inlined_call_operand.hbm [shape: f32[2,8,32], index: 0, kind: input, shape index: {}]
  %s1 = inlined_call_operand.hbm [shape: f32[32,32], index: 1, kind: input, shape index: {}]
  %s2 = inlined_call_operand.vmem [shape: f32[1,32], index: 2, kind: input, shape index: {}]
  %s3 = inlined_call_operand.hbm [shape: f32[32,64], index: 3, kind: input, shape index: {}]
  %s4 = inlined_call_operand.vmem [shape: f32[1,64], index: 4, kind: input, shape index: {}]
  %s5 = inlined_call_operand.hbm [shape: f32[32,32], index: 5, kind: input, shape index: {}]
  %s6 = inlined_call_operand.vmem [shape: f32[1,32], index: 6, kind: input, shape index: {}]
  %s7 = inlined_call_operand.hbm [shape: f32[2,8,32], index: 7, kind: output, shape index: {}]
  %s8 = sld [smem:[#allocation0]]
  $region81: #{tpu_custom_call.1} parent=0
    _
  %s10 = ssub.s32 1, %s8
  %s11 = scalar_select 0, %s10, %s8
  $region1: #{tpu_custom_call.1} parent=0
    #allocation5 [shape = 'u8[8192]{0}', space=vmem, size = 0x2000, scoped, tag = 'input window, operand 0']
    #allocation6 [shape = 's32[2]{0}', space=sflag, size = 0x8, scoped, tag = 'scoped memory for tpu_custom_call.1']
    #allocation7 [shape = 's32[2]{0}', space=sflag, size = 0x8, scoped, tag = 'scoped memory for tpu_custom_call.1']
    #allocation8 [shape = 'u8[16384]{0}', space=vmem, size = 0x4000, scoped, tag = 'input window, operand 1, single buffered']
    #allocation9 [shape = 's32[1]{0}', space=sflag, size = 0x4, scoped, tag = 'scoped memory for tpu_custom_call.1']
    #allocation10 [shape = 'u8[16384]{0}', space=vmem, size = 0x4000, scoped, tag = 'input window, operand 3, single buffered']
    #allocation11 [shape = 'u8[16384]{0}', space=vmem, size = 0x4000, scoped, tag = 'input window, operand 5, single buffered']
    #allocation12 [shape = 's32[1]{0}', space=sflag, size = 0x4, scoped, tag = 'scoped memory for tpu_custom_call.1']
    #allocation13 [shape = 'u8[8192]{0}', space=vmem, size = 0x2000, scoped, tag = 'output window, operand 0']
    %12 = vsyncpa [#allocation6], 0
    %s13 = scalar_lea.sflag [#allocation6], 1
    %14 = vsyncpa %s13, 0
    %15 = vsyncpa [#allocation9], 0
    %16 = vsyncpa [#allocation12], 0
    %17 = vsyncpa [#allocation7], 0
    %s18 = scalar_lea.sflag [#allocation7], 1
    %19 = vsyncpa %s18, 0
    loop: start=0, step=1, limit=4
    $region2: #{tpu_custom_call.1} parent=1 // loop_pre_header
      _
    $region3: #{tpu_custom_call.1} parent=1 // loop_header
      %s21 = sphi 0, %s25
      %p22 = scmp.ge.s32.totalorder %s21, 4
      %s28 = sphi 0, %s40
      %s29 = sphi 0, %s36
      %s30 = sphi 0, %s28
      %s31 = sphi 0, %s29
      %s32 = sphi 0, %s30
      %s33 = sphi 0, %s31
      %s43 = sphi 0, %s45
      %s46 = sphi 0, %s43
      %s47 = sphi 0, %s46
      %s63 = sphi 0, %s47
      %s67 = sphi 0, %s67
      %s69 = sphi 0, %s67
      %s70 = sphi 0, %s69
      %s84 = sphi 0, %s70
      %s88 = sphi 0, %s88
      %s90 = sphi 0, %s88
      %s91 = sphi 0, %s90
      %s105 = sphi 0, %s91
      %s109 = sphi 0, %s109
      %s111 = sphi 0, %s109
      %s112 = sphi 0, %s111
      %s126 = sphi 0, %s112
      %s130 = sphi 0, %s130
      %s132 = sphi 0, %s130
      %s133 = sphi 0, %s132
      %s147 = sphi 0, %s133
      %s151 = sphi 0, %s151
      %s153 = sphi 0, %s151
      %s154 = sphi 0, %s153
      %s168 = sphi 0, %s154
      %s172 = sphi 0, %s172
      %s174 = sphi 0, %s172
      %s175 = sphi 0, %s174
      %s189 = sphi 0, %s175
      %s197 = sphi 0, %s199
      %s200 = sphi 0, %s197
      %s201 = sphi 0, %s200
      %s217 = sphi 0, %s201
    $region4: #{tpu_custom_call.1} parent=1 // loop_header_branch
      %24 = sbr.rel (%p22) target = $region8
    $region5: #{tpu_custom_call.1} parent=1 // loop_body
      %s26 = ssub.s32 %s21, 1
      %s27 = ssub.s32 %s21, 2
      %s34 = sadd.s32 1, %s29
      %p35 = scmp.ge.s32.totalorder %s34, 1
      %s36 = scalar_select %p35, 0, %s34
      %s37 = sadd.s32 1, %s28
      %s38 = scalar_select %p35, %s37, %s28
      %p39 = scmp.ge.s32.totalorder %s38, 2
      %s40 = scalar_select %p39, 0, %s38
      %s41 = ssub.s32 %s28, %s40
      %p42 = scmp.eq.s32.totalorder %s41, 0
      %s44 = sadd.s32 %s43, 1
      %s45 = scalar_select %p42, %s43, %s44
      %p48 = pneg %p42
      %p49 = scmp.eq.s32.totalorder %s21, 1
      %p50 = por %p48, %p49
      %p51 = scmp.ne.s32.totalorder %s43, %s46
      %p52 = scmp.eq.s32.totalorder %s21, 0
      %p53 = por %p51, %p52
      %p54 = scmp.ne.s32.totalorder %s43, %s46
      %p55 = scmp.eq.s32.totalorder %s26, 1
      %p56 = por %p54, %p55
      %p57 = scmp.ne.s32.totalorder %s46, %s47
      %p58 = scmp.eq.s32.totalorder %s26, 0
      %p59 = por %p57, %p58
      %p60 = scmp.ne.s32.totalorder %s46, %s47
      %p61 = scmp.eq.s32.totalorder %s27, 1
      %p62 = por %p60, %p61
      %p64 = scmp.ne.s32.totalorder %s47, %s63
      %p65 = scmp.eq.s32.totalorder %s27, 0
      %p66 = por %p64, %p65
      %s68 = sadd.s32 %s67, 1
      %p71 = scmp.eq.s32.totalorder %s21, 1
      %p72 = scmp.ne.s32.totalorder %s67, %s69
      %p73 = scmp.eq.s32.totalorder %s21, 0
      %p74 = por %p72, %p73
      %p75 = scmp.ne.s32.totalorder %s67, %s69
      %p76 = scmp.eq.s32.totalorder %s26, 1
      %p77 = por %p75, %p76
      %p78 = scmp.ne.s32.totalorder %s69, %s70
      %p79 = scmp.eq.s32.totalorder %s26, 0
      %p80 = por %p78, %p79
      %p81 = scmp.ne.s32.totalorder %s69, %s70
      %p82 = scmp.eq.s32.totalorder %s27, 1
      %p83 = por %p81, %p82
      %p85 = scmp.ne.s32.totalorder %s70, %s84
      %p86 = scmp.eq.s32.totalorder %s27, 0
      %p87 = por %p85, %p86
      %s89 = sadd.s32 %s88, 1
      %p92 = scmp.eq.s32.totalorder %s21, 1
      %p93 = scmp.ne.s32.totalorder %s88, %s90
      %p94 = scmp.eq.s32.totalorder %s21, 0
      %p95 = por %p93, %p94
      %p96 = scmp.ne.s32.totalorder %s88, %s90
      %p97 = scmp.eq.s32.totalorder %s26, 1
      %p98 = por %p96, %p97
      %p99 = scmp.ne.s32.totalorder %s90, %s91
      %p100 = scmp.eq.s32.totalorder %s26, 0
      %p101 = por %p99, %p100
      %p102 = scmp.ne.s32.totalorder %s90, %s91
      %p103 = scmp.eq.s32.totalorder %s27, 1
      %p104 = por %p102, %p103
      %p106 = scmp.ne.s32.totalorder %s91, %s105
      %p107 = scmp.eq.s32.totalorder %s27, 0
      %p108 = por %p106, %p107
      %s110 = sadd.s32 %s109, 1
      %p113 = scmp.eq.s32.totalorder %s21, 1
      %p114 = scmp.ne.s32.totalorder %s109, %s111
      %p115 = scmp.eq.s32.totalorder %s21, 0
      %p116 = por %p114, %p115
      %p117 = scmp.ne.s32.totalorder %s109, %s111
      %p118 = scmp.eq.s32.totalorder %s26, 1
      %p119 = por %p117, %p118
      %p120 = scmp.ne.s32.totalorder %s111, %s112
      %p121 = scmp.eq.s32.totalorder %s26, 0
      %p122 = por %p120, %p121
      %p123 = scmp.ne.s32.totalorder %s111, %s112
      %p124 = scmp.eq.s32.totalorder %s27, 1
      %p125 = por %p123, %p124
      %p127 = scmp.ne.s32.totalorder %s112, %s126
      %p128 = scmp.eq.s32.totalorder %s27, 0
      %p129 = por %p127, %p128
      %s131 = sadd.s32 %s130, 1
      %p134 = scmp.eq.s32.totalorder %s21, 1
      %p135 = scmp.ne.s32.totalorder %s130, %s132
      %p136 = scmp.eq.s32.totalorder %s21, 0
      %p137 = por %p135, %p136
      %p138 = scmp.ne.s32.totalorder %s130, %s132
      %p139 = scmp.eq.s32.totalorder %s26, 1
      %p140 = por %p138, %p139
      %p141 = scmp.ne.s32.totalorder %s132, %s133
      %p142 = scmp.eq.s32.totalorder %s26, 0
      %p143 = por %p141, %p142
      %p144 = scmp.ne.s32.totalorder %s132, %s133
      %p145 = scmp.eq.s32.totalorder %s27, 1
      %p146 = por %p144, %p145
      %p148 = scmp.ne.s32.totalorder %s133, %s147
      %p149 = scmp.eq.s32.totalorder %s27, 0
      %p150 = por %p148, %p149
      %s152 = sadd.s32 %s151, 1
      %p155 = scmp.eq.s32.totalorder %s21, 1
      %p156 = scmp.ne.s32.totalorder %s151, %s153
      %p157 = scmp.eq.s32.totalorder %s21, 0
      %p158 = por %p156, %p157
      %p159 = scmp.ne.s32.totalorder %s151, %s153
      %p160 = scmp.eq.s32.totalorder %s26, 1
      %p161 = por %p159, %p160
      %p162 = scmp.ne.s32.totalorder %s153, %s154
      %p163 = scmp.eq.s32.totalorder %s26, 0
      %p164 = por %p162, %p163
      %p165 = scmp.ne.s32.totalorder %s153, %s154
      %p166 = scmp.eq.s32.totalorder %s27, 1
      %p167 = por %p165, %p166
      %p169 = scmp.ne.s32.totalorder %s154, %s168
      %p170 = scmp.eq.s32.totalorder %s27, 0
      %p171 = por %p169, %p170
      %s173 = sadd.s32 %s172, 1
      %p176 = scmp.eq.s32.totalorder %s21, 1
      %p177 = scmp.ne.s32.totalorder %s172, %s174
      %p178 = scmp.eq.s32.totalorder %s21, 0
      %p179 = por %p177, %p178
      %p180 = scmp.ne.s32.totalorder %s172, %s174
      %p181 = scmp.eq.s32.totalorder %s26, 1
      %p182 = por %p180, %p181
      %p183 = scmp.ne.s32.totalorder %s174, %s175
      %p184 = scmp.eq.s32.totalorder %s26, 0
      %p185 = por %p183, %p184
      %p186 = scmp.ne.s32.totalorder %s174, %s175
      %p187 = scmp.eq.s32.totalorder %s27, 1
      %p188 = por %p186, %p187
      %p190 = scmp.ne.s32.totalorder %s175, %s189
      %p191 = scmp.eq.s32.totalorder %s27, 0
      %p192 = por %p190, %p191
      %s193 = ssub.s32 %s28, %s40
      %s194 = ssub.s32 %s29, %s36
      %s195 = sor.u32 %s193, %s194
      %p196 = scmp.eq.s32.totalorder %s195, 0
      %s198 = sadd.s32 %s197, 1
      %s199 = scalar_select %p196, %s197, %s198
      %p202 = pneg %p196
      %p203 = scmp.eq.s32.totalorder %s21, 1
      %p204 = por %p202, %p203
      %p205 = scmp.ne.s32.totalorder %s197, %s200
      %p206 = scmp.eq.s32.totalorder %s21, 0
      %p207 = por %p205, %p206
      %p208 = scmp.ne.s32.totalorder %s197, %s200
      %p209 = scmp.eq.s32.totalorder %s26, 1
      %p210 = por %p208, %p209
      %p211 = scmp.ne.s32.totalorder %s200, %s201
      %p212 = scmp.eq.s32.totalorder %s26, 0
      %p213 = por %p211, %p212
      %p214 = scmp.ne.s32.totalorder %s200, %s201
      %p215 = scmp.eq.s32.totalorder %s27, 1
      %p216 = por %p214, %p215
      %p218 = scmp.ne.s32.totalorder %s201, %s217
      %p219 = scmp.eq.s32.totalorder %s27, 0
      %p220 = por %p218, %p219
      %p221 = scmp.le.s32.totalorder 1, %s21
      %p222 = scmp.lt.s32.totalorder %s21, 3
      %p223 = pnand %p221, %p222
      %p224 = pneg %p223
      // Predicated region
      $region9: #{tpu_custom_call.1} parent=5 // pred_check
        _
      $region10: #{tpu_custom_call.1} parent=5 // pred_check_branch
        %226 = sbr.rel (%p223) target = $region12
      $region11: #{tpu_custom_call.1} parent=5 // pred_region
        %s227 = ssub.s32 %s21, 1
        // Predicated region
        $region13: #{tpu_custom_call.1} parent=11 // pred_check
          %p228 = pneg %p80
        $region14: #{tpu_custom_call.1} parent=11 // pred_check_branch
          %230 = sbr.rel (%p228) target = $region16
        $region15: #{tpu_custom_call.1} parent=11 // pred_region
          %s232 = ssub.s32 512, 512
          %233 = vsyncadd [#allocation9], %s232
          %s234 = sshll.u32 [#allocation8], 4
          %s235 = int_to_ptr.vmem [resolvable:$true] %s234
          %240 = dma.hbm_to_vmem [thread:$0]  %s1, 512, %s235, [#allocation9], 128, 128, 8
        $region16: #{tpu_custom_call.1} parent=11 // pred_fallthru
          _
        // Predicated region
        $region17: #{tpu_custom_call.1} parent=11 // pred_check
          %p241 = pneg %p101
        $region18: #{tpu_custom_call.1} parent=11 // pred_check_branch
          %243 = sbr.rel (%p241) target = $region20
        $region19: #{tpu_custom_call.1} parent=11 // pred_region
          _
        $region20: #{tpu_custom_call.1} parent=11 // pred_fallthru
          _
        // Predicated region
        $region21: #{tpu_custom_call.1} parent=11 // pred_check
          %p244 = pneg %p122
        $region22: #{tpu_custom_call.1} parent=11 // pred_check_branch
          %246 = sbr.rel (%p244) target = $region24
        $region23: #{tpu_custom_call.1} parent=11 // pred_region
          %s248 = ssub.s32 512, 512
          %249 = vsyncadd [#allocation9], %s248
          %s250 = sshll.u32 [#allocation10], 4
          %s251 = int_to_ptr.vmem [resolvable:$true] %s250
          %256 = dma.hbm_to_vmem [thread:$0]  %s3, 512, %s251, [#allocation9], 128, 128, 8
        $region24: #{tpu_custom_call.1} parent=11 // pred_fallthru
          _
        // Predicated region
        $region25: #{tpu_custom_call.1} parent=11 // pred_check
          %p257 = pneg %p143
        $region26: #{tpu_custom_call.1} parent=11 // pred_check_branch
          %259 = sbr.rel (%p257) target = $region28
        $region27: #{tpu_custom_call.1} parent=11 // pred_region
          _
        $region28: #{tpu_custom_call.1} parent=11 // pred_fallthru
          _
        // Predicated region
        $region29: #{tpu_custom_call.1} parent=11 // pred_check
          %p260 = pneg %p164
        $region30: #{tpu_custom_call.1} parent=11 // pred_check_branch
          %262 = sbr.rel (%p260) target = $region32
        $region31: #{tpu_custom_call.1} parent=11 // pred_region
          %s264 = ssub.s32 512, 512
          %265 = vsyncadd [#allocation12], %s264
          %s266 = sshll.u32 [#allocation11], 4
          %s267 = int_to_ptr.vmem [resolvable:$true] %s266
          %272 = dma.hbm_to_vmem [thread:$0]  %s5, 512, %s267, [#allocation12], 128, 128, 8
        $region32: #{tpu_custom_call.1} parent=11 // pred_fallthru
          _
        // Predicated region
        $region33: #{tpu_custom_call.1} parent=11 // pred_check
          %p273 = pneg %p185
        $region34: #{tpu_custom_call.1} parent=11 // pred_check_branch
          %275 = sbr.rel (%p273) target = $region36
        $region35: #{tpu_custom_call.1} parent=11 // pred_region
          _
        $region36: #{tpu_custom_call.1} parent=11 // pred_fallthru
          _
      $region12: #{tpu_custom_call.1} parent=5 // pred_fallthru
        _
      %p276 = scmp.lt.s32.totalorder %s21, 2
      // Predicated region
      $region37: #{tpu_custom_call.1} parent=5 // pred_check
        %p277 = pneg %p276
      $region38: #{tpu_custom_call.1} parent=5 // pred_check_branch
        %279 = sbr.rel (%p277) target = $region40
      $region39: #{tpu_custom_call.1} parent=5 // pred_region
        // Predicated region
        $region41: #{tpu_custom_call.1} parent=39 // pred_check
          %p280 = pneg %p53
        $region42: #{tpu_custom_call.1} parent=39 // pred_check_branch
          %282 = sbr.rel (%p280) target = $region44
        $region43: #{tpu_custom_call.1} parent=39 // pred_region
          %s283 = sand.u32 %s43, 1
          %s284 = scalar_lea.sflag [#allocation6], %s283
          %s285 = sand.u32 %s43, 1
          %s286 = smul.addr %s285, 8
          %s287 = scalar_lea.vmem [#allocation5], %s286
          %s289 = ssub.s32 128, 128
          %290 = vsyncadd %s284, %s289
          %s291 = smul.addr %s28, 128
          %s292 = scalar_lea.hbm %s0, %s291
          %s294 = sshll.u32 %s287, 4
          %s295 = int_to_ptr.vmem [resolvable:$true] %s294
          %297 = dma.hbm_to_vmem [thread:$0]  %s292, 128, %s295, %s284
        $region44: #{tpu_custom_call.1} parent=39 // pred_fallthru
          _
      $region40: #{tpu_custom_call.1} parent=5 // pred_fallthru
        _
      %p298 = scmp.le.s32.totalorder 1, %s21
      %p299 = scmp.lt.s32.totalorder %s21, 3
      %p300 = pnand %p298, %p299
      %p301 = pneg %p300
      // Predicated region
      $region45: #{tpu_custom_call.1} parent=5 // pred_check
        _
      $region46: #{tpu_custom_call.1} parent=5 // pred_check_branch
        %303 = sbr.rel (%p300) target = $region48
      $region47: #{tpu_custom_call.1} parent=5 // pred_region
        %s304 = ssub.s32 %s21, 1
        %s305 = sand.u32 %s46, 1
        %s306 = scalar_lea.sflag [#allocation6], %s305
        %s307 = sand.u32 %s46, 1
        %s308 = smul.addr %s307, 8
        %s309 = scalar_lea.vmem [#allocation5], %s308
        // Predicated region
        $region49: #{tpu_custom_call.1} parent=47 // pred_check
          %p310 = pneg %p59
        $region50: #{tpu_custom_call.1} parent=47 // pred_check_branch
          %312 = sbr.rel (%p310) target = $region52
        $region51: #{tpu_custom_call.1} parent=47 // pred_region
          %313 = dma.done %s306, 128
        $region52: #{tpu_custom_call.1} parent=47 // pred_fallthru
          _
        // Predicated region
        $region53: #{tpu_custom_call.1} parent=47 // pred_check
          %p314 = pneg %p80
        $region54: #{tpu_custom_call.1} parent=47 // pred_check_branch
          %316 = sbr.rel (%p314) target = $region56
        $region55: #{tpu_custom_call.1} parent=47 // pred_region
          %317 = dma.done [#allocation9], 512
        $region56: #{tpu_custom_call.1} parent=47 // pred_fallthru
          _
        // Predicated region
        $region57: #{tpu_custom_call.1} parent=47 // pred_check
          %p318 = pneg %p122
        $region58: #{tpu_custom_call.1} parent=47 // pred_check_branch
          %320 = sbr.rel (%p318) target = $region60
        $region59: #{tpu_custom_call.1} parent=47 // pred_region
          %321 = dma.done [#allocation9], 512
        $region60: #{tpu_custom_call.1} parent=47 // pred_fallthru
          _
        // Predicated region
        $region61: #{tpu_custom_call.1} parent=47 // pred_check
          %p322 = pneg %p164
        $region62: #{tpu_custom_call.1} parent=47 // pred_check_branch
          %324 = sbr.rel (%p322) target = $region64
        $region63: #{tpu_custom_call.1} parent=47 // pred_region
          %325 = dma.done [#allocation12], 512
        $region64: #{tpu_custom_call.1} parent=47 // pred_fallthru
          _
        %s326 = sand.u32 %s46, 1
        %s327 = scalar_lea.sflag [#allocation6], %s326
        %s328 = sand.u32 %s46, 1
        %s329 = smul.addr %s328, 8
        %s330 = scalar_lea.vmem [#allocation5], %s329
        %p331 = pneg %p59
        %p332 = pneg %p56
        %p333 = pneg %p80
        %p334 = pneg %p77
        %p335 = pneg %p101
        %p336 = pneg %p98
        %p337 = pneg %p122
        %p338 = pneg %p119
        %p339 = pneg %p143
        %p340 = pneg %p140
        %p341 = pneg %p164
        %p342 = pneg %p161
        %p343 = pneg %p185
        %p344 = pneg %p182
        %p345 = pneg %p213
        %p346 = pneg %p210
        %s347 = sand.u32 %s200, 1
        %s348 = scalar_lea.sflag [#allocation7], %s347
        %s349 = sand.u32 %s200, 1
        %s350 = smul.addr %s349, 8
        %s351 = scalar_lea.vmem [#allocation13], %s350
        %p352 = scmp.eq.s32.totalorder %s31, 0
        // Predicated region
        $region65: #{tpu_custom_call.1} parent=47 // pred_check
          %p353 = pneg %p352
        $region66: #{tpu_custom_call.1} parent=47 // pred_check_branch
          %355 = sbr.rel (%p353) target = $region68
        $region67: #{tpu_custom_call.1} parent=47 // pred_region
          %v356 = vld [vmem:[#allocation10] sm:$0xff]
          %v357 = vld [vmem:[#allocation10 + $0x8] sm:$0xff]
          %v358 = vld [vmem:[#allocation10 + $0x10] sm:$0xff]
          %v359 = vld [vmem:[#allocation10 + $0x18] sm:$0xff]
          %v360 = vld [vmem:[%s4] sm:$0x1]
          %v361 = vld [vmem:[%s309] sm:$0xff]
          %v363 = vlaneseq
          %v364 = vshrl.u32 %v363, 7
          %v365 = vsub.s32 0, %v364
          %v366 = vrot.slane %v360, %v365
          %vm368 = vcmask 261120
          %v370 = vsel %vm368, %v361, 0
          %372 = vmatprep.subr.mxu0 0.0
          %373 = vmatpush1.msra.mxu0 0.0
          %374 = vmatprep.subr.mxu0 0.0
          %375 = vmatpush1.msra.mxu0 0.0
          %376 = vmatprep.subr.mxu0 0.0
          %377 = vmatpush1.msra.mxu0 0.0
          %378 = vmatprep.subr.mxu0 0.0
          %379 = vmatpush1.msra.mxu0 0.0
          %380 = vmatprep.subr.mxu0 0.0
          %381 = vmatpush1.msra.mxu0 0.0
          %382 = vmatprep.subr.mxu0 0.0
          %383 = vmatpush1.msra.mxu0 0.0
          %384 = vmatprep.subr.mxu0 0.0
          %385 = vmatpush1.msra.mxu0 0.0
          %386 = vmatprep.subr.mxu0 0.0
          %387 = vmatpush1.msra.mxu0 0.0
          %388 = vmatprep.subr.mxu0 0.0
          %389 = vmatpush1.msra.mxu0 0.0
          %390 = vmatprep.subr.mxu0 0.0
          %391 = vmatpush1.msra.mxu0 0.0
          %392 = vmatprep.subr.mxu0 0.0
          %393 = vmatpush1.msra.mxu0 0.0
          %394 = vmatprep.subr.mxu0 0.0
          %395 = vmatpush1.msra.mxu0 0.0
          %396 = vmatprep.subr.mxu0 0.0
          %397 = vmatpush1.msra.mxu0 %v359
          %398 = vmatprep.subr.mxu0 0.0
          %399 = vmatpush1.msra.mxu0 %v358
          %400 = vmatprep.subr.mxu0 0.0
          %401 = vmatpush1.msra.mxu0 %v357
          %402 = vmatprep.subr.mxu0 0.0
          %403 = vmatpush1.msra.mxu0 %v356
          %404 = vmatprep.subr.mxu0 0.0
          %405 = vmatpush2.msra.mxu0 0.0
          %406 = vmatprep.subr.mxu0 0.0
          %407 = vmatpush2.msra.mxu0 0.0
          %408 = vmatprep.subr.mxu0 0.0
          %409 = vmatpush2.msra.mxu0 0.0
          %410 = vmatprep.subr.mxu0 0.0
          %411 = vmatpush2.msra.mxu0 0.0
          %412 = vmatprep.subr.mxu0 0.0
          %413 = vmatpush2.msra.mxu0 0.0
          %414 = vmatprep.subr.mxu0 0.0
          %415 = vmatpush2.msra.mxu0 0.0
          %416 = vmatprep.subr.mxu0 0.0
          %417 = vmatpush2.msra.mxu0 0.0
          %418 = vmatprep.subr.mxu0 0.0
          %419 = vmatpush2.msra.mxu0 0.0
          %420 = vmatprep.subr.mxu0 0.0
          %421 = vmatpush2.msra.mxu0 0.0
          %422 = vmatprep.subr.mxu0 0.0
          %423 = vmatpush2.msra.mxu0 0.0
          %424 = vmatprep.subr.mxu0 0.0
          %425 = vmatpush2.msra.mxu0 0.0
          %426 = vmatprep.subr.mxu0 0.0
          %427 = vmatpush2.msra.mxu0 0.0
          %428 = vmatprep.subr.mxu0 0.0
          %429 = vmatpush2.msra.mxu0 0.0
          %430 = vmatprep.subr.mxu0 0.0
          %431 = vmatpush2.msra.mxu0 0.0
          %432 = vmatprep.subr.mxu0 0.0
          %433 = vmatpush2.msra.mxu0 0.0
          %434 = vmatprep.subr.mxu0 0.0
          %435 = vmatpush2.msra.mxu0 0.0
          %436 = vmatprep.mubr.f32.mxu0 0.0
          %437 = vmatmul.mubr.f32.gmra.mxu0 %v370
          %v438 = vpop.f32.mrf.mxu0
          %v439 = vadd.f32 %v366, %v438
          %v440 = vpop.f32.mrf.mxu0
          %441 = vdwg.mxu0
          %vm442 = vcmask 523264
          %443 = vst.msk [vmem:[#allocation2] sm:$0xff] %vm442, %v439
        $region68: #{tpu_custom_call.1} parent=47 // pred_fallthru
          _
        %s444 = smul.u32 %s31, 8
        %s445 = scalar_lea.vmem %s309, %s444 [#allocation5]
        %v446 = vld [vmem:[%s445] sm:$0xff]
        %v447 = vld [vmem:[#allocation8] sm:$0xff]
        %v448 = vld [vmem:[#allocation8 + $0x8] sm:$0xff]
        %v449 = vld [vmem:[#allocation8 + $0x10] sm:$0xff]
        %v450 = vld [vmem:[#allocation8 + $0x18] sm:$0xff]
        %v451 = vld [vmem:[%s2] sm:$0x1]
        %v453 = vlaneseq
        %v454 = vshrl.u32 %v453, 7
        %v455 = vsub.s32 0, %v454
        %v456 = vrot.slane %v451, %v455
        %vm458 = vcmask 261120
        %v460 = vsel %vm458, %v446, 0
        %462 = vmatprep.subr.mxu0 0.0
        %463 = vmatpush1.msra.mxu0 0.0
        %464 = vmatprep.subr.mxu0 0.0
        %465 = vmatpush1.msra.mxu0 0.0
        %466 = vmatprep.subr.mxu0 0.0
        %467 = vmatpush1.msra.mxu0 0.0
        %468 = vmatprep.subr.mxu0 0.0
        %469 = vmatpush1.msra.mxu0 0.0
        %470 = vmatprep.subr.mxu0 0.0
        %471 = vmatpush1.msra.mxu0 0.0
        %472 = vmatprep.subr.mxu0 0.0
        %473 = vmatpush1.msra.mxu0 0.0
        %474 = vmatprep.subr.mxu0 0.0
        %475 = vmatpush1.msra.mxu0 0.0
        %476 = vmatprep.subr.mxu0 0.0
        %477 = vmatpush1.msra.mxu0 0.0
        %478 = vmatprep.subr.mxu0 0.0
        %479 = vmatpush1.msra.mxu0 0.0
        %480 = vmatprep.subr.mxu0 0.0
        %481 = vmatpush1.msra.mxu0 0.0
        %482 = vmatprep.subr.mxu0 0.0
        %483 = vmatpush1.msra.mxu0 0.0
        %484 = vmatprep.subr.mxu0 0.0
        %485 = vmatpush1.msra.mxu0 0.0
        %486 = vmatprep.subr.mxu0 0.0
        %487 = vmatpush1.msra.mxu0 %v450
        %488 = vmatprep.subr.mxu0 0.0
        %489 = vmatpush1.msra.mxu0 %v449
        %490 = vmatprep.subr.mxu0 0.0
        %491 = vmatpush1.msra.mxu0 %v448
        %492 = vmatprep.subr.mxu0 0.0
        %493 = vmatpush1.msra.mxu0 %v447
        %494 = vmatprep.subr.mxu0 0.0
        %495 = vmatpush2.msra.mxu0 0.0
        %496 = vmatprep.subr.mxu0 0.0
        %497 = vmatpush2.msra.mxu0 0.0
        %498 = vmatprep.subr.mxu0 0.0
        %499 = vmatpush2.msra.mxu0 0.0
        %500 = vmatprep.subr.mxu0 0.0
        %501 = vmatpush2.msra.mxu0 0.0
        %502 = vmatprep.subr.mxu0 0.0
        %503 = vmatpush2.msra.mxu0 0.0
        %504 = vmatprep.subr.mxu0 0.0
        %505 = vmatpush2.msra.mxu0 0.0
        %506 = vmatprep.subr.mxu0 0.0
        %507 = vmatpush2.msra.mxu0 0.0
        %508 = vmatprep.subr.mxu0 0.0
        %509 = vmatpush2.msra.mxu0 0.0
        %510 = vmatprep.subr.mxu0 0.0
        %511 = vmatpush2.msra.mxu0 0.0
        %512 = vmatprep.subr.mxu0 0.0
        %513 = vmatpush2.msra.mxu0 0.0
        %514 = vmatprep.subr.mxu0 0.0
        %515 = vmatpush2.msra.mxu0 0.0
        %516 = vmatprep.subr.mxu0 0.0
        %517 = vmatpush2.msra.mxu0 0.0
        %518 = vmatprep.subr.mxu0 0.0
        %519 = vmatpush2.msra.mxu0 0.0
        %520 = vmatprep.subr.mxu0 0.0
        %521 = vmatpush2.msra.mxu0 0.0
        %522 = vmatprep.subr.mxu0 0.0
        %523 = vmatpush2.msra.mxu0 0.0
        %524 = vmatprep.subr.mxu0 0.0
        %525 = vmatpush2.msra.mxu0 0.0
        %526 = vmatprep.mubr.f32.mxu0 0.0
        %527 = vmatmul.mubr.f32.gmra.mxu0 %v460
        %v528 = vpop.f32.mrf.mxu0
        %v529 = vadd.f32 %v456, %v528
        %v530 = vpop.f32.mrf.mxu0
        %531 = vdwg.mxu0
        %v532 = vmul.f32 %v529, 0.35355338
        %533 = vst.msk [vmem:[#allocation3] sm:$0xff] %vm458, %v532
        %v534 = vld [vmem:[#allocation3] sm:$0xff]
        %v535 = vld [vmem:[#allocation2] sm:$0xff]
        %vm536 = vcmask 64512
        %v538 = vsel %vm536, %v534, 0
        %v541 = vsel %vm536, %v535, 0
        %543 = vmatprep.subr.mxu0 0.0
        %544 = vmatpush1.xpose.msra.mxu0 0.0
        %545 = vmatprep.subr.mxu0 0.0
        %546 = vmatpush1.xpose.msra.mxu0 0.0
        %547 = vmatprep.subr.mxu0 0.0
        %548 = vmatpush1.xpose.msra.mxu0 0.0
        %549 = vmatprep.subr.mxu0 0.0
        %550 = vmatpush1.xpose.msra.mxu0 0.0
        %551 = vmatprep.subr.mxu0 0.0
        %552 = vmatpush1.xpose.msra.mxu0 0.0
        %553 = vmatprep.subr.mxu0 0.0
        %554 = vmatpush1.xpose.msra.mxu0 0.0
        %555 = vmatprep.subr.mxu0 0.0
        %556 = vmatpush1.xpose.msra.mxu0 0.0
        %557 = vmatprep.subr.mxu0 0.0
        %558 = vmatpush1.xpose.msra.mxu0 0.0
        %559 = vmatprep.subr.mxu0 0.0
        %560 = vmatpush1.xpose.msra.mxu0 0.0
        %561 = vmatprep.subr.mxu0 0.0
        %562 = vmatpush1.xpose.msra.mxu0 0.0
        %563 = vmatprep.subr.mxu0 0.0
        %564 = vmatpush1.xpose.msra.mxu0 0.0
        %565 = vmatprep.subr.mxu0 0.0
        %566 = vmatpush1.xpose.msra.mxu0 0.0
        %567 = vmatprep.subr.mxu0 0.0
        %568 = vmatpush1.xpose.msra.mxu0 0.0
        %569 = vmatprep.subr.mxu0 0.0
        %570 = vmatpush1.xpose.msra.mxu0 0.0
        %571 = vmatprep.subr.mxu0 0.0
        %572 = vmatpush1.xpose.msra.mxu0 0.0
        %573 = vmatprep.subr.mxu0 0.0
        %574 = vmatpush1.xpose.msra.mxu0 %v541
        %575 = vmatprep.subr.mxu0 0.0
        %576 = vmatpush2.xpose.msra.mxu0 0.0
        %577 = vmatprep.subr.mxu0 0.0
        %578 = vmatpush2.xpose.msra.mxu0 0.0
        %579 = vmatprep.subr.mxu0 0.0
        %580 = vmatpush2.xpose.msra.mxu0 0.0
        %581 = vmatprep.subr.mxu0 0.0
        %582 = vmatpush2.xpose.msra.mxu0 0.0
        %583 = vmatprep.subr.mxu0 0.0
        %584 = vmatpush2.xpose.msra.mxu0 0.0
        %585 = vmatprep.subr.mxu0 0.0
        %586 = vmatpush2.xpose.msra.mxu0 0.0
        %587 = vmatprep.subr.mxu0 0.0
        %588 = vmatpush2.xpose.msra.mxu0 0.0
        %589 = vmatprep.subr.mxu0 0.0
        %590 = vmatpush2.xpose.msra.mxu0 0.0
        %591 = vmatprep.subr.mxu0 0.0
        %592 = vmatpush2.xpose.msra.mxu0 0.0
        %593 = vmatprep.subr.mxu0 0.0
        %594 = vmatpush2.xpose.msra.mxu0 0.0
        %595 = vmatprep.subr.mxu0 0.0
        %596 = vmatpush2.xpose.msra.mxu0 0.0
        %597 = vmatprep.subr.mxu0 0.0
        %598 = vmatpush2.xpose.msra.mxu0 0.0
        %599 = vmatprep.subr.mxu0 0.0
        %600 = vmatpush2.xpose.msra.mxu0 0.0
        %601 = vmatprep.subr.mxu0 0.0
        %602 = vmatpush2.xpose.msra.mxu0 0.0
        %603 = vmatprep.subr.mxu0 0.0
        %604 = vmatpush2.xpose.msra.mxu0 0.0
        %605 = vmatprep.subr.mxu0 0.0
        %606 = vmatpush2.xpose.msra.mxu0 0.0
        %607 = vmatprep.mubr.f32.mxu0 0.0
        %608 = vmatmul.mubr.f32.gmra.mxu0 %v538
        %v609 = vpop.f32.mrf.mxu0
        %v610 = vadd.f32 0.0, %v609
        %v611 = vpop.f32.mrf.mxu0
        %612 = vdwg.mxu0
        %v613 = vsel %vm536, %v610, -inf
        %614 = vmax.xlane.f32.xlu0 %v613
        %v615 = vpop.xlane.xlu0 %614
        %v616 = vsub.f32 %v610, %v615
        %v617 = vmul.f32 %v616, 1.442695
        %v618 = vpow.pop %v617
        %v619 = vsel %vm536, %v618, 0.0
        %620 = vadd.xlane.f32.xlu0 %v619
        %v621 = vpop.xlane.xlu0 %620
        %622 = vrot.lane.b32.xlu0 %v535, 96
        %v623 = vpop.permute.xlu0 %622
        %v626 = vsel %vm536, %v618, 0
        %628 = vmatprep.subr.mxu0 0.0
        %629 = vmatpush1.msra.mxu0 0.0
        %630 = vmatprep.subr.mxu0 0.0
        %631 = vmatpush1.msra.mxu0 0.0
        %632 = vmatprep.subr.mxu0 0.0
        %633 = vmatpush1.msra.mxu0 0.0
        %634 = vmatprep.subr.mxu0 0.0
        %635 = vmatpush1.msra.mxu0 0.0
        %636 = vmatprep.subr.mxu0 0.0
        %637 = vmatpush1.msra.mxu0 0.0
        %638 = vmatprep.subr.mxu0 0.0
        %639 = vmatpush1.msra.mxu0 0.0
        %640 = vmatprep.subr.mxu0 0.0
        %641 = vmatpush1.msra.mxu0 0.0
        %642 = vmatprep.subr.mxu0 0.0
        %643 = vmatpush1.msra.mxu0 0.0
        %644 = vmatprep.subr.mxu0 0.0
        %645 = vmatpush1.msra.mxu0 0.0
        %646 = vmatprep.subr.mxu0 0.0
        %647 = vmatpush1.msra.mxu0 0.0
        %648 = vmatprep.subr.mxu0 0.0
        %649 = vmatpush1.msra.mxu0 0.0
        %650 = vmatprep.subr.mxu0 0.0
        %651 = vmatpush1.msra.mxu0 0.0
        %652 = vmatprep.subr.mxu0 0.0
        %653 = vmatpush1.msra.mxu0 0.0
        %654 = vmatprep.subr.mxu0 0.0
        %655 = vmatpush1.msra.mxu0 0.0
        %656 = vmatprep.subr.mxu0 0.0
        %657 = vmatpush1.msra.mxu0 0.0
        %658 = vmatprep.subr.mxu0 0.0
        %659 = vmatpush1.msra.mxu0 %v623
        %660 = vmatprep.subr.mxu0 0.0
        %661 = vmatpush2.msra.mxu0 0.0
        %662 = vmatprep.subr.mxu0 0.0
        %663 = vmatpush2.msra.mxu0 0.0
        %664 = vmatprep.subr.mxu0 0.0
        %665 = vmatpush2.msra.mxu0 0.0
        %666 = vmatprep.subr.mxu0 0.0
        %667 = vmatpush2.msra.mxu0 0.0
        %668 = vmatprep.subr.mxu0 0.0
        %669 = vmatpush2.msra.mxu0 0.0
        %670 = vmatprep.subr.mxu0 0.0
        %671 = vmatpush2.msra.mxu0 0.0
        %672 = vmatprep.subr.mxu0 0.0
        %673 = vmatpush2.msra.mxu0 0.0
        %674 = vmatprep.subr.mxu0 0.0
        %675 = vmatpush2.msra.mxu0 0.0
        %676 = vmatprep.subr.mxu0 0.0
        %677 = vmatpush2.msra.mxu0 0.0
        %678 = vmatprep.subr.mxu0 0.0
        %679 = vmatpush2.msra.mxu0 0.0
        %680 = vmatprep.subr.mxu0 0.0
        %681 = vmatpush2.msra.mxu0 0.0
        %682 = vmatprep.subr.mxu0 0.0
        %683 = vmatpush2.msra.mxu0 0.0
        %684 = vmatprep.subr.mxu0 0.0
        %685 = vmatpush2.msra.mxu0 0.0
        %686 = vmatprep.subr.mxu0 0.0
        %687 = vmatpush2.msra.mxu0 0.0
        %688 = vmatprep.subr.mxu0 0.0
        %689 = vmatpush2.msra.mxu0 0.0
        %690 = vmatprep.subr.mxu0 0.0
        %691 = vmatpush2.msra.mxu0 0.0
        %692 = vmatprep.mubr.f32.mxu0 0.0
        %693 = vmatmul.mubr.f32.gmra.mxu0 %v626
        %v694 = vpop.f32.mrf.mxu0
        %v695 = vadd.f32 0.0, %v694
        %v696 = vpop.f32.mrf.mxu0
        %697 = vdwg.mxu0
        %v698 = vrcp.pop %v621
        %v699 = vmul.f32 %v695, %v698
        %700 = vst.msk [vmem:[#allocation4] sm:$0xff] %vm536, %v699
        %v701 = vld [vmem:[#allocation3] sm:$0xff]
        %v702 = vld [vmem:[#allocation2] sm:$0xff]
        %704 = vrot.lane.b32.xlu0 %v701, 120
        %v705 = vpop.permute.xlu0 %704
        %707 = vrot.lane.b32.xlu0 %v702, 120
        %v708 = vpop.permute.xlu0 %707
        %v709 = vsel %vm536, %v705, 0
        %v711 = vsel %vm536, %v708, 0
        %713 = vmatprep.subr.mxu0 0.0
        %714 = vmatpush1.xpose.msra.mxu0 0.0
        %715 = vmatprep.subr.mxu0 0.0
        %716 = vmatpush1.xpose.msra.mxu0 0.0
        %717 = vmatprep.subr.mxu0 0.0
        %718 = vmatpush1.xpose.msra.mxu0 0.0
        %719 = vmatprep.subr.mxu0 0.0
        %720 = vmatpush1.xpose.msra.mxu0 0.0
        %721 = vmatprep.subr.mxu0 0.0
        %722 = vmatpush1.xpose.msra.mxu0 0.0
        %723 = vmatprep.subr.mxu0 0.0
        %724 = vmatpush1.xpose.msra.mxu0 0.0
        %725 = vmatprep.subr.mxu0 0.0
        %726 = vmatpush1.xpose.msra.mxu0 0.0
        %727 = vmatprep.subr.mxu0 0.0
        %728 = vmatpush1.xpose.msra.mxu0 0.0
        %729 = vmatprep.subr.mxu0 0.0
        %730 = vmatpush1.xpose.msra.mxu0 0.0
        %731 = vmatprep.subr.mxu0 0.0
        %732 = vmatpush1.xpose.msra.mxu0 0.0
        %733 = vmatprep.subr.mxu0 0.0
        %734 = vmatpush1.xpose.msra.mxu0 0.0
        %735 = vmatprep.subr.mxu0 0.0
        %736 = vmatpush1.xpose.msra.mxu0 0.0
        %737 = vmatprep.subr.mxu0 0.0
        %738 = vmatpush1.xpose.msra.mxu0 0.0
        %739 = vmatprep.subr.mxu0 0.0
        %740 = vmatpush1.xpose.msra.mxu0 0.0
        %741 = vmatprep.subr.mxu0 0.0
        %742 = vmatpush1.xpose.msra.mxu0 0.0
        %743 = vmatprep.subr.mxu0 0.0
        %744 = vmatpush1.xpose.msra.mxu0 %v711
        %745 = vmatprep.subr.mxu0 0.0
        %746 = vmatpush2.xpose.msra.mxu0 0.0
        %747 = vmatprep.subr.mxu0 0.0
        %748 = vmatpush2.xpose.msra.mxu0 0.0
        %749 = vmatprep.subr.mxu0 0.0
        %750 = vmatpush2.xpose.msra.mxu0 0.0
        %751 = vmatprep.subr.mxu0 0.0
        %752 = vmatpush2.xpose.msra.mxu0 0.0
        %753 = vmatprep.subr.mxu0 0.0
        %754 = vmatpush2.xpose.msra.mxu0 0.0
        %755 = vmatprep.subr.mxu0 0.0
        %756 = vmatpush2.xpose.msra.mxu0 0.0
        %757 = vmatprep.subr.mxu0 0.0
        %758 = vmatpush2.xpose.msra.mxu0 0.0
        %759 = vmatprep.subr.mxu0 0.0
        %760 = vmatpush2.xpose.msra.mxu0 0.0
        %761 = vmatprep.subr.mxu0 0.0
        %762 = vmatpush2.xpose.msra.mxu0 0.0
        %763 = vmatprep.subr.mxu0 0.0
        %764 = vmatpush2.xpose.msra.mxu0 0.0
        %765 = vmatprep.subr.mxu0 0.0
        %766 = vmatpush2.xpose.msra.mxu0 0.0
        %767 = vmatprep.subr.mxu0 0.0
        %768 = vmatpush2.xpose.msra.mxu0 0.0
        %769 = vmatprep.subr.mxu0 0.0
        %770 = vmatpush2.xpose.msra.mxu0 0.0
        %771 = vmatprep.subr.mxu0 0.0
        %772 = vmatpush2.xpose.msra.mxu0 0.0
        %773 = vmatprep.subr.mxu0 0.0
        %774 = vmatpush2.xpose.msra.mxu0 0.0
        %775 = vmatprep.subr.mxu0 0.0
        %776 = vmatpush2.xpose.msra.mxu0 0.0
        %777 = vmatprep.mubr.f32.mxu0 0.0
        %778 = vmatmul.mubr.f32.gmra.mxu0 %v709
        %v779 = vpop.f32.mrf.mxu0
        %v780 = vadd.f32 0.0, %v779
        %v781 = vpop.f32.mrf.mxu0
        %782 = vdwg.mxu0
        %v783 = vsel %vm536, %v780, -inf
        %784 = vmax.xlane.f32.xlu0 %v783
        %v785 = vpop.xlane.xlu0 %784
        %v786 = vsub.f32 %v780, %v785
        %v787 = vmul.f32 %v786, 1.442695
        %v788 = vpow.pop %v787
        %v789 = vsel %vm536, %v788, 0.0
        %790 = vadd.xlane.f32.xlu0 %v789
        %v791 = vpop.xlane.xlu0 %790
        %792 = vrot.lane.b32.xlu0 %v702, 88
        %v793 = vpop.permute.xlu0 %792
        %v796 = vsel %vm536, %v788, 0
        %798 = vmatprep.subr.mxu0 0.0
        %799 = vmatpush1.msra.mxu0 0.0
        %800 = vmatprep.subr.mxu0 0.0
        %801 = vmatpush1.msra.mxu0 0.0
        %802 = vmatprep.subr.mxu0 0.0
        %803 = vmatpush1.msra.mxu0 0.0
        %804 = vmatprep.subr.mxu0 0.0
        %805 = vmatpush1.msra.mxu0 0.0
        %806 = vmatprep.subr.mxu0 0.0
        %807 = vmatpush1.msra.mxu0 0.0
        %808 = vmatprep.subr.mxu0 0.0
        %809 = vmatpush1.msra.mxu0 0.0
        %810 = vmatprep.subr.mxu0 0.0
        %811 = vmatpush1.msra.mxu0 0.0
        %812 = vmatprep.subr.mxu0 0.0
        %813 = vmatpush1.msra.mxu0 0.0
        %814 = vmatprep.subr.mxu0 0.0
        %815 = vmatpush1.msra.mxu0 0.0
        %816 = vmatprep.subr.mxu0 0.0
        %817 = vmatpush1.msra.mxu0 0.0
        %818 = vmatprep.subr.mxu0 0.0
        %819 = vmatpush1.msra.mxu0 0.0
        %820 = vmatprep.subr.mxu0 0.0
        %821 = vmatpush1.msra.mxu0 0.0
        %822 = vmatprep.subr.mxu0 0.0
        %823 = vmatpush1.msra.mxu0 0.0
        %824 = vmatprep.subr.mxu0 0.0
        %825 = vmatpush1.msra.mxu0 0.0
        %826 = vmatprep.subr.mxu0 0.0
        %827 = vmatpush1.msra.mxu0 0.0
        %828 = vmatprep.subr.mxu0 0.0
        %829 = vmatpush1.msra.mxu0 %v793
        %830 = vmatprep.subr.mxu0 0.0
        %831 = vmatpush2.msra.mxu0 0.0
        %832 = vmatprep.subr.mxu0 0.0
        %833 = vmatpush2.msra.mxu0 0.0
        %834 = vmatprep.subr.mxu0 0.0
        %835 = vmatpush2.msra.mxu0 0.0
        %836 = vmatprep.subr.mxu0 0.0
        %837 = vmatpush2.msra.mxu0 0.0
        %838 = vmatprep.subr.mxu0 0.0
        %839 = vmatpush2.msra.mxu0 0.0
        %840 = vmatprep.subr.mxu0 0.0
        %841 = vmatpush2.msra.mxu0 0.0
        %842 = vmatprep.subr.mxu0 0.0
        %843 = vmatpush2.msra.mxu0 0.0
        %844 = vmatprep.subr.mxu0 0.0
        %845 = vmatpush2.msra.mxu0 0.0
        %846 = vmatprep.subr.mxu0 0.0
        %847 = vmatpush2.msra.mxu0 0.0
        %848 = vmatprep.subr.mxu0 0.0
        %849 = vmatpush2.msra.mxu0 0.0
        %850 = vmatprep.subr.mxu0 0.0
        %851 = vmatpush2.msra.mxu0 0.0
        %852 = vmatprep.subr.mxu0 0.0
        %853 = vmatpush2.msra.mxu0 0.0
        %854 = vmatprep.subr.mxu0 0.0
        %855 = vmatpush2.msra.mxu0 0.0
        %856 = vmatprep.subr.mxu0 0.0
        %857 = vmatpush2.msra.mxu0 0.0
        %858 = vmatprep.subr.mxu0 0.0
        %859 = vmatpush2.msra.mxu0 0.0
        %860 = vmatprep.subr.mxu0 0.0
        %861 = vmatpush2.msra.mxu0 0.0
        %862 = vmatprep.mubr.f32.mxu0 0.0
        %863 = vmatmul.mubr.f32.gmra.mxu0 %v796
        %v864 = vpop.f32.mrf.mxu0
        %v865 = vadd.f32 0.0, %v864
        %v866 = vpop.f32.mrf.mxu0
        %867 = vdwg.mxu0
        %v868 = vrcp.pop %v791
        %v869 = vmul.f32 %v865, %v868
        %871 = vrot.lane.b32.xlu0 %v869, 8
        %v872 = vpop.permute.xlu0 %871
        %vm874 = vcmask 130112
        %875 = vst.msk [vmem:[#allocation4] sm:$0xff] %vm874, %v872
        %v876 = vld [vmem:[#allocation3] sm:$0xff]
        %v877 = vld [vmem:[#allocation2] sm:$0xff]
        %879 = vrot.lane.b32.xlu0 %v876, 112
        %v880 = vpop.permute.xlu0 %879
        %882 = vrot.lane.b32.xlu0 %v877, 112
        %v883 = vpop.permute.xlu0 %882
        %v884 = vsel %vm536, %v880, 0
        %v886 = vsel %vm536, %v883, 0
        %888 = vmatprep.subr.mxu0 0.0
        %889 = vmatpush1.xpose.msra.mxu0 0.0
        %890 = vmatprep.subr.mxu0 0.0
        %891 = vmatpush1.xpose.msra.mxu0 0.0
        %892 = vmatprep.subr.mxu0 0.0
        %893 = vmatpush1.xpose.msra.mxu0 0.0
        %894 = vmatprep.subr.mxu0 0.0
        %895 = vmatpush1.xpose.msra.mxu0 0.0
        %896 = vmatprep.subr.mxu0 0.0
        %897 = vmatpush1.xpose.msra.mxu0 0.0
        %898 = vmatprep.subr.mxu0 0.0
        %899 = vmatpush1.xpose.msra.mxu0 0.0
        %900 = vmatprep.subr.mxu0 0.0
        %901 = vmatpush1.xpose.msra.mxu0 0.0
        %902 = vmatprep.subr.mxu0 0.0
        %903 = vmatpush1.xpose.msra.mxu0 0.0
        %904 = vmatprep.subr.mxu0 0.0
        %905 = vmatpush1.xpose.msra.mxu0 0.0
        %906 = vmatprep.subr.mxu0 0.0
        %907 = vmatpush1.xpose.msra.mxu0 0.0
        %908 = vmatprep.subr.mxu0 0.0
        %909 = vmatpush1.xpose.msra.mxu0 0.0
        %910 = vmatprep.subr.mxu0 0.0
        %911 = vmatpush1.xpose.msra.mxu0 0.0
        %912 = vmatprep.subr.mxu0 0.0
        %913 = vmatpush1.xpose.msra.mxu0 0.0
        %914 = vmatprep.subr.mxu0 0.0
        %915 = vmatpush1.xpose.msra.mxu0 0.0
        %916 = vmatprep.subr.mxu0 0.0
        %917 = vmatpush1.xpose.msra.mxu0 0.0
        %918 = vmatprep.subr.mxu0 0.0
        %919 = vmatpush1.xpose.msra.mxu0 %v886
        %920 = vmatprep.subr.mxu0 0.0
        %921 = vmatpush2.xpose.msra.mxu0 0.0
        %922 = vmatprep.subr.mxu0 0.0
        %923 = vmatpush2.xpose.msra.mxu0 0.0
        %924 = vmatprep.subr.mxu0 0.0
        %925 = vmatpush2.xpose.msra.mxu0 0.0
        %926 = vmatprep.subr.mxu0 0.0
        %927 = vmatpush2.xpose.msra.mxu0 0.0
        %928 = vmatprep.subr.mxu0 0.0
        %929 = vmatpush2.xpose.msra.mxu0 0.0
        %930 = vmatprep.subr.mxu0 0.0
        %931 = vmatpush2.xpose.msra.mxu0 0.0
        %932 = vmatprep.subr.mxu0 0.0
        %933 = vmatpush2.xpose.msra.mxu0 0.0
        %934 = vmatprep.subr.mxu0 0.0
        %935 = vmatpush2.xpose.msra.mxu0 0.0
        %936 = vmatprep.subr.mxu0 0.0
        %937 = vmatpush2.xpose.msra.mxu0 0.0
        %938 = vmatprep.subr.mxu0 0.0
        %939 = vmatpush2.xpose.msra.mxu0 0.0
        %940 = vmatprep.subr.mxu0 0.0
        %941 = vmatpush2.xpose.msra.mxu0 0.0
        %942 = vmatprep.subr.mxu0 0.0
        %943 = vmatpush2.xpose.msra.mxu0 0.0
        %944 = vmatprep.subr.mxu0 0.0
        %945 = vmatpush2.xpose.msra.mxu0 0.0
        %946 = vmatprep.subr.mxu0 0.0
        %947 = vmatpush2.xpose.msra.mxu0 0.0
        %948 = vmatprep.subr.mxu0 0.0
        %949 = vmatpush2.xpose.msra.mxu0 0.0
        %950 = vmatprep.subr.mxu0 0.0
        %951 = vmatpush2.xpose.msra.mxu0 0.0
        %952 = vmatprep.mubr.f32.mxu0 0.0
        %953 = vmatmul.mubr.f32.gmra.mxu0 %v884
        %v954 = vpop.f32.mrf.mxu0
        %v955 = vadd.f32 0.0, %v954
        %v956 = vpop.f32.mrf.mxu0
        %957 = vdwg.mxu0
        %v958 = vsel %vm536, %v955, -inf
        %959 = vmax.xlane.f32.xlu0 %v958
        %v960 = vpop.xlane.xlu0 %959
        %v961 = vsub.f32 %v955, %v960
        %v962 = vmul.f32 %v961, 1.442695
        %v963 = vpow.pop %v962
        %v964 = vsel %vm536, %v963, 0.0
        %965 = vadd.xlane.f32.xlu0 %v964
        %v966 = vpop.xlane.xlu0 %965
        %967 = vrot.lane.b32.xlu0 %v877, 80
        %v968 = vpop.permute.xlu0 %967
        %v971 = vsel %vm536, %v963, 0
        %973 = vmatprep.subr.mxu0 0.0
        %974 = vmatpush1.msra.mxu0 0.0
        %975 = vmatprep.subr.mxu0 0.0
        %976 = vmatpush1.msra.mxu0 0.0
        %977 = vmatprep.subr.mxu0 0.0
        %978 = vmatpush1.msra.mxu0 0.0
        %979 = vmatprep.subr.mxu0 0.0
        %980 = vmatpush1.msra.mxu0 0.0
        %981 = vmatprep.subr.mxu0 0.0
        %982 = vmatpush1.msra.mxu0 0.0
        %983 = vmatprep.subr.mxu0 0.0
        %984 = vmatpush1.msra.mxu0 0.0
        %985 = vmatprep.subr.mxu0 0.0
        %986 = vmatpush1.msra.mxu0 0.0
        %987 = vmatprep.subr.mxu0 0.0
        %988 = vmatpush1.msra.mxu0 0.0
        %989 = vmatprep.subr.mxu0 0.0
        %990 = vmatpush1.msra.mxu0 0.0
        %991 = vmatprep.subr.mxu0 0.0
        %992 = vmatpush1.msra.mxu0 0.0
        %993 = vmatprep.subr.mxu0 0.0
        %994 = vmatpush1.msra.mxu0 0.0
        %995 = vmatprep.subr.mxu0 0.0
        %996 = vmatpush1.msra.mxu0 0.0
        %997 = vmatprep.subr.mxu0 0.0
        %998 = vmatpush1.msra.mxu0 0.0
        %999 = vmatprep.subr.mxu0 0.0
        %1000 = vmatpush1.msra.mxu0 0.0
        %1001 = vmatprep.subr.mxu0 0.0
        %1002 = vmatpush1.msra.mxu0 0.0
        %1003 = vmatprep.subr.mxu0 0.0
        %1004 = vmatpush1.msra.mxu0 %v968
        %1005 = vmatprep.subr.mxu0 0.0
        %1006 = vmatpush2.msra.mxu0 0.0
        %1007 = vmatprep.subr.mxu0 0.0
        %1008 = vmatpush2.msra.mxu0 0.0
        %1009 = vmatprep.subr.mxu0 0.0
        %1010 = vmatpush2.msra.mxu0 0.0
        %1011 = vmatprep.subr.mxu0 0.0
        %1012 = vmatpush2.msra.mxu0 0.0
        %1013 = vmatprep.subr.mxu0 0.0
        %1014 = vmatpush2.msra.mxu0 0.0
        %1015 = vmatprep.subr.mxu0 0.0
        %1016 = vmatpush2.msra.mxu0 0.0
        %1017 = vmatprep.subr.mxu0 0.0
        %1018 = vmatpush2.msra.mxu0 0.0
        %1019 = vmatprep.subr.mxu0 0.0
        %1020 = vmatpush2.msra.mxu0 0.0
        %1021 = vmatprep.subr.mxu0 0.0
        %1022 = vmatpush2.msra.mxu0 0.0
        %1023 = vmatprep.subr.mxu0 0.0
        %1024 = vmatpush2.msra.mxu0 0.0
        %1025 = vmatprep.subr.mxu0 0.0
        %1026 = vmatpush2.msra.mxu0 0.0
        %1027 = vmatprep.subr.mxu0 0.0
        %1028 = vmatpush2.msra.mxu0 0.0
        %1029 = vmatprep.subr.mxu0 0.0
        %1030 = vmatpush2.msra.mxu0 0.0
        %1031 = vmatprep.subr.mxu0 0.0
        %1032 = vmatpush2.msra.mxu0 0.0
        %1033 = vmatprep.subr.mxu0 0.0
        %1034 = vmatpush2.msra.mxu0 0.0
        %1035 = vmatprep.subr.mxu0 0.0
        %1036 = vmatpush2.msra.mxu0 0.0
        %1037 = vmatprep.mubr.f32.mxu0 0.0
        %1038 = vmatmul.mubr.f32.gmra.mxu0 %v971
        %v1039 = vpop.f32.mrf.mxu0
        %v1040 = vadd.f32 0.0, %v1039
        %v1041 = vpop.f32.mrf.mxu0
        %1042 = vdwg.mxu0
        %v1043 = vrcp.pop %v966
        %v1044 = vmul.f32 %v1040, %v1043
        %1046 = vrot.lane.b32.xlu0 %v1044, 16
        %v1047 = vpop.permute.xlu0 %1046
        %vm1049 = vcmask 195712
        %1050 = vst.msk [vmem:[#allocation4] sm:$0xff] %vm1049, %v1047
        %v1051 = vld [vmem:[#allocation3] sm:$0xff]
        %v1052 = vld [vmem:[#allocation2] sm:$0xff]
        %1054 = vrot.lane.b32.xlu0 %v1051, 104
        %v1055 = vpop.permute.xlu0 %1054
        %1057 = vrot.lane.b32.xlu0 %v1052, 104
        %v1058 = vpop.permute.xlu0 %1057
        %v1059 = vsel %vm536, %v1055, 0
        %v1061 = vsel %vm536, %v1058, 0
        %1063 = vmatprep.subr.mxu0 0.0
        %1064 = vmatpush1.xpose.msra.mxu0 0.0
        %1065 = vmatprep.subr.mxu0 0.0
        %1066 = vmatpush1.xpose.msra.mxu0 0.0
        %1067 = vmatprep.subr.mxu0 0.0
        %1068 = vmatpush1.xpose.msra.mxu0 0.0
        %1069 = vmatprep.subr.mxu0 0.0
        %1070 = vmatpush1.xpose.msra.mxu0 0.0
        %1071 = vmatprep.subr.mxu0 0.0
        %1072 = vmatpush1.xpose.msra.mxu0 0.0
        %1073 = vmatprep.subr.mxu0 0.0
        %1074 = vmatpush1.xpose.msra.mxu0 0.0
        %1075 = vmatprep.subr.mxu0 0.0
        %1076 = vmatpush1.xpose.msra.mxu0 0.0
        %1077 = vmatprep.subr.mxu0 0.0
        %1078 = vmatpush1.xpose.msra.mxu0 0.0
        %1079 = vmatprep.subr.mxu0 0.0
        %1080 = vmatpush1.xpose.msra.mxu0 0.0
        %1081 = vmatprep.subr.mxu0 0.0
        %1082 = vmatpush1.xpose.msra.mxu0 0.0
        %1083 = vmatprep.subr.mxu0 0.0
        %1084 = vmatpush1.xpose.msra.mxu0 0.0
        %1085 = vmatprep.subr.mxu0 0.0
        %1086 = vmatpush1.xpose.msra.mxu0 0.0
        %1087 = vmatprep.subr.mxu0 0.0
        %1088 = vmatpush1.xpose.msra.mxu0 0.0
        %1089 = vmatprep.subr.mxu0 0.0
        %1090 = vmatpush1.xpose.msra.mxu0 0.0
        %1091 = vmatprep.subr.mxu0 0.0
        %1092 = vmatpush1.xpose.msra.mxu0 0.0
        %1093 = vmatprep.subr.mxu0 0.0
        %1094 = vmatpush1.xpose.msra.mxu0 %v1061
        %1095 = vmatprep.subr.mxu0 0.0
        %1096 = vmatpush2.xpose.msra.mxu0 0.0
        %1097 = vmatprep.subr.mxu0 0.0
        %1098 = vmatpush2.xpose.msra.mxu0 0.0
        %1099 = vmatprep.subr.mxu0 0.0
        %1100 = vmatpush2.xpose.msra.mxu0 0.0
        %1101 = vmatprep.subr.mxu0 0.0
        %1102 = vmatpush2.xpose.msra.mxu0 0.0
        %1103 = vmatprep.subr.mxu0 0.0
        %1104 = vmatpush2.xpose.msra.mxu0 0.0
        %1105 = vmatprep.subr.mxu0 0.0
        %1106 = vmatpush2.xpose.msra.mxu0 0.0
        %1107 = vmatprep.subr.mxu0 0.0
        %1108 = vmatpush2.xpose.msra.mxu0 0.0
        %1109 = vmatprep.subr.mxu0 0.0
        %1110 = vmatpush2.xpose.msra.mxu0 0.0
        %1111 = vmatprep.subr.mxu0 0.0
        %1112 = vmatpush2.xpose.msra.mxu0 0.0
        %1113 = vmatprep.subr.mxu0 0.0
        %1114 = vmatpush2.xpose.msra.mxu0 0.0
        %1115 = vmatprep.subr.mxu0 0.0
        %1116 = vmatpush2.xpose.msra.mxu0 0.0
        %1117 = vmatprep.subr.mxu0 0.0
        %1118 = vmatpush2.xpose.msra.mxu0 0.0
        %1119 = vmatprep.subr.mxu0 0.0
        %1120 = vmatpush2.xpose.msra.mxu0 0.0
        %1121 = vmatprep.subr.mxu0 0.0
        %1122 = vmatpush2.xpose.msra.mxu0 0.0
        %1123 = vmatprep.subr.mxu0 0.0
        %1124 = vmatpush2.xpose.msra.mxu0 0.0
        %1125 = vmatprep.subr.mxu0 0.0
        %1126 = vmatpush2.xpose.msra.mxu0 0.0
        %1127 = vmatprep.mubr.f32.mxu0 0.0
        %1128 = vmatmul.mubr.f32.gmra.mxu0 %v1059
        %v1129 = vpop.f32.mrf.mxu0
        %v1130 = vadd.f32 0.0, %v1129
        %v1131 = vpop.f32.mrf.mxu0
        %1132 = vdwg.mxu0
        %v1133 = vsel %vm536, %v1130, -inf
        %1134 = vmax.xlane.f32.xlu0 %v1133
        %v1135 = vpop.xlane.xlu0 %1134
        %v1136 = vsub.f32 %v1130, %v1135
        %v1137 = vmul.f32 %v1136, 1.442695
        %v1138 = vpow.pop %v1137
        %v1139 = vsel %vm536, %v1138, 0.0
        %1140 = vadd.xlane.f32.xlu0 %v1139
        %v1141 = vpop.xlane.xlu0 %1140
        %1142 = vrot.lane.b32.xlu0 %v1052, 72
        %v1143 = vpop.permute.xlu0 %1142
        %v1146 = vsel %vm536, %v1138, 0
        %1148 = vmatprep.subr.mxu0 0.0
        %1149 = vmatpush1.msra.mxu0 0.0
        %1150 = vmatprep.subr.mxu0 0.0
        %1151 = vmatpush1.msra.mxu0 0.0
        %1152 = vmatprep.subr.mxu0 0.0
        %1153 = vmatpush1.msra.mxu0 0.0
        %1154 = vmatprep.subr.mxu0 0.0
        %1155 = vmatpush1.msra.mxu0 0.0
        %1156 = vmatprep.subr.mxu0 0.0
        %1157 = vmatpush1.msra.mxu0 0.0
        %1158 = vmatprep.subr.mxu0 0.0
        %1159 = vmatpush1.msra.mxu0 0.0
        %1160 = vmatprep.subr.mxu0 0.0
        %1161 = vmatpush1.msra.mxu0 0.0
        %1162 = vmatprep.subr.mxu0 0.0
        %1163 = vmatpush1.msra.mxu0 0.0
        %1164 = vmatprep.subr.mxu0 0.0
        %1165 = vmatpush1.msra.mxu0 0.0
        %1166 = vmatprep.subr.mxu0 0.0
        %1167 = vmatpush1.msra.mxu0 0.0
        %1168 = vmatprep.subr.mxu0 0.0
        %1169 = vmatpush1.msra.mxu0 0.0
        %1170 = vmatprep.subr.mxu0 0.0
        %1171 = vmatpush1.msra.mxu0 0.0
        %1172 = vmatprep.subr.mxu0 0.0
        %1173 = vmatpush1.msra.mxu0 0.0
        %1174 = vmatprep.subr.mxu0 0.0
        %1175 = vmatpush1.msra.mxu0 0.0
        %1176 = vmatprep.subr.mxu0 0.0
        %1177 = vmatpush1.msra.mxu0 0.0
        %1178 = vmatprep.subr.mxu0 0.0
        %1179 = vmatpush1.msra.mxu0 %v1143
        %1180 = vmatprep.subr.mxu0 0.0
        %1181 = vmatpush2.msra.mxu0 0.0
        %1182 = vmatprep.subr.mxu0 0.0
        %1183 = vmatpush2.msra.mxu0 0.0
        %1184 = vmatprep.subr.mxu0 0.0
        %1185 = vmatpush2.msra.mxu0 0.0
        %1186 = vmatprep.subr.mxu0 0.0
        %1187 = vmatpush2.msra.mxu0 0.0
        %1188 = vmatprep.subr.mxu0 0.0
        %1189 = vmatpush2.msra.mxu0 0.0
        %1190 = vmatprep.subr.mxu0 0.0
        %1191 = vmatpush2.msra.mxu0 0.0
        %1192 = vmatprep.subr.mxu0 0.0
        %1193 = vmatpush2.msra.mxu0 0.0
        %1194 = vmatprep.subr.mxu0 0.0
        %1195 = vmatpush2.msra.mxu0 0.0
        %1196 = vmatprep.subr.mxu0 0.0
        %1197 = vmatpush2.msra.mxu0 0.0
        %1198 = vmatprep.subr.mxu0 0.0
        %1199 = vmatpush2.msra.mxu0 0.0
        %1200 = vmatprep.subr.mxu0 0.0
        %1201 = vmatpush2.msra.mxu0 0.0
        %1202 = vmatprep.subr.mxu0 0.0
        %1203 = vmatpush2.msra.mxu0 0.0
        %1204 = vmatprep.subr.mxu0 0.0
        %1205 = vmatpush2.msra.mxu0 0.0
        %1206 = vmatprep.subr.mxu0 0.0
        %1207 = vmatpush2.msra.mxu0 0.0
        %1208 = vmatprep.subr.mxu0 0.0
        %1209 = vmatpush2.msra.mxu0 0.0
        %1210 = vmatprep.subr.mxu0 0.0
        %1211 = vmatpush2.msra.mxu0 0.0
        %1212 = vmatprep.mubr.f32.mxu0 0.0
        %1213 = vmatmul.mubr.f32.gmra.mxu0 %v1146
        %v1214 = vpop.f32.mrf.mxu0
        %v1215 = vadd.f32 0.0, %v1214
        %v1216 = vpop.f32.mrf.mxu0
        %1217 = vdwg.mxu0
        %v1218 = vrcp.pop %v1141
        %v1219 = vmul.f32 %v1215, %v1218
        %1221 = vrot.lane.b32.xlu0 %v1219, 24
        %v1222 = vpop.permute.xlu0 %1221
        %vm1224 = vcmask 261312
        %1225 = vst.msk [vmem:[#allocation4] sm:$0xff] %vm1224, %v1222
        %v1226 = vld [vmem:[#allocation4] sm:$0xff]
        %v1227 = vld [vmem:[#allocation11] sm:$0xff]
        %v1228 = vld [vmem:[#allocation11 + $0x8] sm:$0xff]
        %v1229 = vld [vmem:[#allocation11 + $0x10] sm:$0xff]
        %v1230 = vld [vmem:[#allocation11 + $0x18] sm:$0xff]
        %v1231 = vld [vmem:[%s6] sm:$0x1]
        %v1233 = vlaneseq
        %v1234 = vshrl.u32 %v1233, 7
        %v1235 = vsub.s32 0, %v1234
        %v1236 = vrot.slane %v1231, %v1235
        %v1239 = vsel %vm458, %v1226, 0
        %1241 = vmatprep.subr.mxu0 0.0
        %1242 = vmatpush1.msra.mxu0 0.0
        %1243 = vmatprep.subr.mxu0 0.0
        %1244 = vmatpush1.msra.mxu0 0.0
        %1245 = vmatprep.subr.mxu0 0.0
        %1246 = vmatpush1.msra.mxu0 0.0
        %1247 = vmatprep.subr.mxu0 0.0
        %1248 = vmatpush1.msra.mxu0 0.0
        %1249 = vmatprep.subr.mxu0 0.0
        %1250 = vmatpush1.msra.mxu0 0.0
        %1251 = vmatprep.subr.mxu0 0.0
        %1252 = vmatpush1.msra.mxu0 0.0
        %1253 = vmatprep.subr.mxu0 0.0
        %1254 = vmatpush1.msra.mxu0 0.0
        %1255 = vmatprep.subr.mxu0 0.0
        %1256 = vmatpush1.msra.mxu0 0.0
        %1257 = vmatprep.subr.mxu0 0.0
        %1258 = vmatpush1.msra.mxu0 0.0
        %1259 = vmatprep.subr.mxu0 0.0
        %1260 = vmatpush1.msra.mxu0 0.0
        %1261 = vmatprep.subr.mxu0 0.0
        %1262 = vmatpush1.msra.mxu0 0.0
        %1263 = vmatprep.subr.mxu0 0.0
        %1264 = vmatpush1.msra.mxu0 0.0
        %1265 = vmatprep.subr.mxu0 0.0
        %1266 = vmatpush1.msra.mxu0 %v1230
        %1267 = vmatprep.subr.mxu0 0.0
        %1268 = vmatpush1.msra.mxu0 %v1229
        %1269 = vmatprep.subr.mxu0 0.0
        %1270 = vmatpush1.msra.mxu0 %v1228
        %1271 = vmatprep.subr.mxu0 0.0
        %1272 = vmatpush1.msra.mxu0 %v1227
        %1273 = vmatprep.subr.mxu0 0.0
        %1274 = vmatpush2.msra.mxu0 0.0
        %1275 = vmatprep.subr.mxu0 0.0
        %1276 = vmatpush2.msra.mxu0 0.0
        %1277 = vmatprep.subr.mxu0 0.0
        %1278 = vmatpush2.msra.mxu0 0.0
        %1279 = vmatprep.subr.mxu0 0.0
        %1280 = vmatpush2.msra.mxu0 0.0
        %1281 = vmatprep.subr.mxu0 0.0
        %1282 = vmatpush2.msra.mxu0 0.0
        %1283 = vmatprep.subr.mxu0 0.0
        %1284 = vmatpush2.msra.mxu0 0.0
        %1285 = vmatprep.subr.mxu0 0.0
        %1286 = vmatpush2.msra.mxu0 0.0
        %1287 = vmatprep.subr.mxu0 0.0
        %1288 = vmatpush2.msra.mxu0 0.0
        %1289 = vmatprep.subr.mxu0 0.0
        %1290 = vmatpush2.msra.mxu0 0.0
        %1291 = vmatprep.subr.mxu0 0.0
        %1292 = vmatpush2.msra.mxu0 0.0
        %1293 = vmatprep.subr.mxu0 0.0
        %1294 = vmatpush2.msra.mxu0 0.0
        %1295 = vmatprep.subr.mxu0 0.0
        %1296 = vmatpush2.msra.mxu0 0.0
        %1297 = vmatprep.subr.mxu0 0.0
        %1298 = vmatpush2.msra.mxu0 0.0
        %1299 = vmatprep.subr.mxu0 0.0
        %1300 = vmatpush2.msra.mxu0 0.0
        %1301 = vmatprep.subr.mxu0 0.0
        %1302 = vmatpush2.msra.mxu0 0.0
        %1303 = vmatprep.subr.mxu0 0.0
        %1304 = vmatpush2.msra.mxu0 0.0
        %1305 = vmatprep.mubr.f32.mxu0 0.0
        %1306 = vmatmul.mubr.f32.gmra.mxu0 %v1239
        %v1307 = vpop.f32.mrf.mxu0
        %v1308 = vadd.f32 %v1236, %v1307
        %v1309 = vpop.f32.mrf.mxu0
        %1310 = vdwg.mxu0
        %1311 = vst.msk [vmem:[%s351] sm:$0xff] %vm458, %v1308
        %s1312 = sand.u32 %s200, 1
        %s1313 = scalar_lea.sflag [#allocation7], %s1312
        %s1314 = sand.u32 %s200, 1
        %s1315 = smul.addr %s1314, 8
        %s1316 = scalar_lea.vmem [#allocation13], %s1315
        // Predicated region
        $region69: #{tpu_custom_call.1} parent=47 // pred_check
          %p1317 = pneg %p210
        $region70: #{tpu_custom_call.1} parent=47 // pred_check_branch
          %1319 = sbr.rel (%p1317) target = $region72
        $region71: #{tpu_custom_call.1} parent=47 // pred_region
          %s1321 = ssub.s32 128, 128
          %1322 = vsyncadd %s1313, %s1321
          %s1323 = sadd.s32 %s31, %s30
          %s1324 = smul.addr %s1323, 128
          %s1325 = scalar_lea.hbm %s7, %s1324
          %s1327 = sshll.u32 %s1316, 4
          %s1328 = int_to_ptr.vmem [resolvable:$true] %s1327
          %1330 = dma.vmem_to_hbm [thread:$0]  %s1328, 128, %s1325, %s1313
        $region72: #{tpu_custom_call.1} parent=47 // pred_fallthru
          _
      $region48: #{tpu_custom_call.1} parent=5 // pred_fallthru
        _
      %p1331 = scmp.le.s32.totalorder 2, %s21
      // Predicated region
      $region73: #{tpu_custom_call.1} parent=5 // pred_check
        %p1332 = pneg %p1331
      $region74: #{tpu_custom_call.1} parent=5 // pred_check_branch
        %1334 = sbr.rel (%p1332) target = $region76
      $region75: #{tpu_custom_call.1} parent=5 // pred_region
        %s1335 = ssub.s32 %s21, 2
        // Predicated region
        $region77: #{tpu_custom_call.1} parent=75 // pred_check
          %p1336 = pneg %p216
        $region78: #{tpu_custom_call.1} parent=75 // pred_check_branch
          %1338 = sbr.rel (%p1336) target = $region80
        $region79: #{tpu_custom_call.1} parent=75 // pred_region
          %s1339 = sand.u32 %s201, 1
          %s1340 = scalar_lea.sflag [#allocation7], %s1339
          %s1341 = sand.u32 %s201, 1
          %s1342 = smul.addr %s1341, 8
          %s1343 = scalar_lea.vmem [#allocation13], %s1342
          %1344 = dma.done %s1340, 128
        $region80: #{tpu_custom_call.1} parent=75 // pred_fallthru
          _
      $region76: #{tpu_custom_call.1} parent=5 // pred_fallthru
        _
    $region6: #{tpu_custom_call.1} parent=1 // loop_footer
      %s25 = sadd.s32 1, %s21
    $region7: #{tpu_custom_call.1} parent=1 // loop_footer_branch
      %20 = sbr.rel target = $region3
    $region8: #{tpu_custom_call.1} parent=1 // loop_exit
      _
    %1345 = vsyncpa [#allocation6], 1
    %s1346 = scalar_lea.sflag [#allocation6], 1
    %1347 = vsyncpa %s1346, 1
    %1348 = vsyncpa [#allocation9], 1
    %1349 = vsyncpa [#allocation12], 1
    %1350 = vsyncpa [#allocation7], 1
    %s1351 = scalar_lea.sflag [#allocation7], 1
    %1352 = vsyncpa %s1351, 1

</llo_original>
